<compile_context>
chip_gen: v6e
topology: v6e:2x2x1
jax: 0.10.0
libtpu: 0.0.40
codegen_flags: <defaults>
</compile_context>

<pallas_src>
import functools

import jax
import jax.numpy as jnp
from jax import lax
from jax.experimental import pallas as pl
from jax.experimental.pallas import tpu as pltpu

BN_EPS = 1e-5
NEG_SLOPE = 0.2
CIN = 3
C1 = 64
C2 = 128
MAX_TS = 8192          # spatial tile (lane axis); multiple of 128


def _lrelu(x):
    return jnp.where(x > 0, x, NEG_SLOPE * x)


def _round_up(x, m):
    return (x + m - 1) // m * m


def _cdiv(a, b):
    return -(-a // b)


def _device_kind():
    try:
        return jax.devices()[0].device_kind.lower()
    except Exception:  # pragma: no cover - defensive
        return ""


def _hidden(x_ref, w1_ref, b1_ref, w2_ref, *, conv1_on_vpu):
    """conv1(3->64)+bias -> lrelu -> conv2(64->128).  x: [3, TS] bf16 -> [128, TS] f32."""
    if conv1_on_vpu:
        # v6e/v7x: the [3, TS] MXU stream fills only 3/16 sublanes per vreg, so
        # conv1 costs ~20% of the MXU pushes for ~2% of the FLOPs.  Do it as
        # three broadcast multiply-adds on the VPU (fits in existing VPU slack)
        # and keep the MXU for conv2.
        x = x_ref[...].astype(jnp.float32)                       # [3, TS]
        w1 = w1_ref[...]                                         # [64, 3] f32
        h1 = w1[:, 0:1] * x[0:1, :] + b1_ref[...]
        h1 = h1 + w1[:, 1:2] * x[1:2, :]
        h1 = h1 + w1[:, 2:3] * x[2:3, :]
    else:
        # v5e: the VPU/store path binds there; keep conv1 on the MXU.
        h1 = jnp.dot(w1_ref[...], x_ref[...],
                     preferred_element_type=jnp.float32) + b1_ref[...]
    h1 = _lrelu(h1)
    return jnp.dot(w2_ref[...], h1.astype(jnp.bfloat16),
                   preferred_element_type=jnp.float32)


def _stats_kernel(x_ref, w1_ref, b1_ref, w2_ref, stats_ref, *, conv1_on_vpu):
    """Pass 1: packed per-tile partial (sum, sum-of-squares) of h2 (f32)."""
    h2 = _hidden(x_ref, w1_ref, b1_ref, w2_ref, conv1_on_vpu=conv1_on_vpu)
    # Padded columns are NOT masked here; their constant contribution
    # (w2 @ lrelu(b1) per column) is subtracted analytically in the glue.
    stats_ref[:, 0:1] = jnp.sum(h2, axis=1, keepdims=True)        # [128, 1]
    stats_ref[:, 1:2] = jnp.sum(h2 * h2, axis=1, keepdims=True)   # [128, 1]


def _apply_kernel(x_ref, w1_ref, b1_ref, w2s_ref, shift_ref, w3_ref, b3_ref,
                  out_ref, logit_ref, *, conv1_on_vpu):
    """Pass 2: recompute h2 (BN scale pre-folded into w2s), shift, lrelu, last_conv, sigmoid."""
    h2 = _hidden(x_ref, w1_ref, b1_ref, w2s_ref, conv1_on_vpu=conv1_on_vpu)
    h2 = _lrelu(h2 + shift_ref[...])                              # BatchNorm + lrelu
    # last_conv 128->1 on VPU + sublane reduce (keeps the MXU free).
    logits = jnp.sum(h2 * w3_ref[...], axis=0, keepdims=True) + b3_ref[...]
    logit_ref[...] = logits                                       # [1, TS] lane-dense
    # approx reciprocal: EUP, ~1e-3 rel error, fine at the stated tolerances.
    out_ref[...] = pl.reciprocal(1.0 + jnp.exp(-logits), approx=True)


def pixelgan_forward(x_nchw, params, *, conv1_on_vpu=None):
    N, C, H, W = x_nchw.shape
    assert C == CIN
    S = H * W

    kind = _device_kind()
    if conv1_on_vpu is None:
        conv1_on_vpu = "v5" not in kind          # MXU conv1 on v5e, VPU elsewhere
    is_v7 = "v7" in kind
    vmem_limit = (48 if is_v7 else 64) * 1024 * 1024

    # Tile selection: as large as possible (amortize ~0.35us per-step cost),
    # but on v7x guarantee >= 4 total grid steps so both TensorCores get work.
    min_steps = 4 if is_v7 else 1
    ts_cap = min(MAX_TS, _round_up(S, 128))
    want_tiles = max(1, min(_cdiv(min_steps, N), _cdiv(S, 128)))
    TS = max(128, min(ts_cap, _round_up(_cdiv(S, want_tiles), 128)))
    S_pad = _round_up(S, TS)
    n_s_tiles = S_pad // TS

    # NCHW -> [N, 3, S]: pure reshape (channels on sublanes, spatial on lanes).
    x3 = x_nchw.reshape(N, CIN, S).astype(jnp.bfloat16)
    if S_pad != S:
        x3 = jnp.pad(x3, ((0, 0), (0, 0), (0, S_pad - S)))

    w1_dtype = jnp.float32 if conv1_on_vpu else jnp.bfloat16
    w1 = params["w1"].astype(w1_dtype)                 # [64, 3]
    b1 = params["b1"].reshape(C1, 1).astype(jnp.float32)   # [64, 1]
    w2 = params["w2"].astype(jnp.bfloat16)             # [128, 64]
    w3 = params["w3"].reshape(C2, 1).astype(jnp.float32)   # [128, 1]
    b3 = params["b3"].reshape(1, 1).astype(jnp.float32)    # [1, 1]

    grid = (N, n_s_tiles)
    x_spec = pl.BlockSpec((None, CIN, TS), lambda n, s: (n, 0, s))
    w_specs = [
        pl.BlockSpec(w1.shape, lambda n, s: (0, 0)),   # resident across grid steps
        pl.BlockSpec(b1.shape, lambda n, s: (0, 0)),
        pl.BlockSpec(w2.shape, lambda n, s: (0, 0)),
    ]
    cparams = pltpu.CompilerParams(
        dimension_semantics=("parallel", "parallel"),
        vmem_limit_bytes=vmem_limit)

    # ---- pass 1: packed partial BatchNorm statistics ----
    stats = pl.pallas_call(
        functools.partial(_stats_kernel, conv1_on_vpu=conv1_on_vpu),
        grid=grid,
        in_specs=[x_spec] + w_specs,
        out_specs=pl.BlockSpec((None, None, C2, 2), lambda n, s: (n, s, 0, 0)),
        out_shape=jax.ShapeDtypeStruct((N, n_s_tiles, C2, 2), jnp.float32),
        compiler_params=cparams,
    )(x3, w1, b1, w2)

    # ---- finalize mean / biased var (tiny, plain JAX) ----
    count = jnp.float32(N * S)
    tot = jnp.sum(stats, axis=(0, 1))                  # [128, 2]
    sum_h2, sumsq_h2 = tot[:, 0], tot[:, 1]
    if S_pad != S:
        # Analytic correction for the zero-padded columns: each contributes a
        # constant h2_pad = w2 @ lrelu(b1) (x=0 path, matching the kernel math).
        h1_pad = jnp.where(params["b1"] > 0, params["b1"], NEG_SLOPE * params["b1"])
        h2_pad = jnp.dot(w2.astype(jnp.float32),
                         h1_pad.astype(jnp.bfloat16).astype(jnp.float32))
        n_pad = jnp.float32(N * (S_pad - S))
        sum_h2 = sum_h2 - n_pad * h2_pad
        sumsq_h2 = sumsq_h2 - n_pad * h2_pad * h2_pad

    mean = sum_h2 / count
    # NOTE: E[x^2]-E[x]^2 in f32 can cancel for |mean| >> std; acceptable here.
    var = jnp.maximum(sumsq_h2 / count - mean * mean, 0.0)
    inv = lax.rsqrt(var + BN_EPS)
    scale = params["gamma"] * inv                              # [128]
    shift = (params["beta"] - mean * scale).reshape(C2, 1)     # [128, 1] f32
    w2s = (scale[:, None] * params["w2"]).astype(jnp.bfloat16)  # BN scale folded into w2

    # ---- pass 2: recompute + shift + lrelu + last_conv + sigmoid ----
    out_spec = pl.BlockSpec((None, 1, TS), lambda n, s: (n, 0, s))
    out3, logit3 = pl.pallas_call(
        functools.partial(_apply_kernel, conv1_on_vpu=conv1_on_vpu),
        grid=grid,
        in_specs=[x_spec] + w_specs + [
            pl.BlockSpec(shift.shape, lambda n, s: (0, 0)),
            pl.BlockSpec(w3.shape, lambda n, s: (0, 0)),
            pl.BlockSpec(b3.shape, lambda n, s: (0, 0)),
        ],
        out_specs=(out_spec, out_spec),
        out_shape=(jax.ShapeDtypeStruct((N, 1, S_pad), jnp.float32),) * 2,
        compiler_params=cparams,
    )(x3, w1, b1, w2s, shift, w3, b3)

    out = out3[:, :, :S].reshape(N, 1, H, W)
    logits = logit3[:, :, :S].reshape(N, 1, H, W)
    return out, logits


def _reference_forward(x_nchw, params):
    """Pure-JAX f32 reference for sanity checking."""
    N, C, H, W = x_nchw.shape
    x = x_nchw.reshape(N, C, H * W)
    h = jnp.einsum("oc,ncs->nos", params["w1"], x) + params["b1"][None, :, None]
    h = jnp.where(h > 0, h, NEG_SLOPE * h)
    h = jnp.einsum("oc,ncs->nos", params["w2"], h)
    mean = jnp.mean(h, axis=(0, 2), keepdims=True)
    var = jnp.mean((h - mean) ** 2, axis=(0, 2), keepdims=True)
    h = (h - mean) / jnp.sqrt(var + BN_EPS)
    h = h * params["gamma"][None, :, None] + params["beta"][None, :, None]
    h = jnp.where(h > 0, h, NEG_SLOPE * h)
    logits = jnp.einsum("c,ncs->ns", params["w3"], h)[:, None, :] + params["b3"][0]
    out = jax.nn.sigmoid(logits)
    return out.reshape(N, 1, H, W), logits.reshape(N, 1, H, W)


def _init_params(key):
    ks = jax.random.split(key, 5)

    def u(k, shape, fan_in):
        bound = 1.0 / (fan_in ** 0.5)
        return jax.random.uniform(k, shape, jnp.float32, -bound, bound)

    # Weights stored as [out, in] (squeezed PyTorch [out, in, 1, 1]).
    return {
        "w1": u(ks[0], (C1, CIN), CIN),
        "b1": u(ks[1], (C1,), CIN),
        "w2": u(ks[2], (C2, C1), C1),
        "gamma": jnp.ones((C2,), jnp.float32),   # BatchNorm affine init
        "beta": jnp.zeros((C2,), jnp.float32),
        "w3": u(ks[3], (C2,), C2),
        "b3": u(ks[4], (1,), C2),
    }


if __name__ == "__main__":
    key = jax.random.PRNGKey(0)
    pkey, xkey = jax.random.split(key)
    params = _init_params(pkey)

    x = jax.random.normal(xkey, (2, 3, 16, 16), jnp.float32)

    out, logits = jax.jit(pixelgan_forward)(x, params)
    jax.block_until_ready((out, logits))

    ref_out, ref_logits = _reference_forward(x, params)
    assert out.shape == (2, 1, 16, 16) and logits.shape == (2, 1, 16, 16)
    assert jnp.allclose(logits, ref_logits, atol=2e-2, rtol=2e-2), float(
        jnp.max(jnp.abs(logits - ref_logits)))
    assert jnp.allclose(out, ref_out, atol=1e-2, rtol=1e-2), float(
        jnp.max(jnp.abs(out - ref_out)))

    print("KERNEL_OK")
</pallas_src>

<mosaic_0001>
module attributes {stable_mosaic.version = 11 : i64} {
  func.func @_stats_kernel(%arg0: i32, %arg1: i32, %arg2: memref<1x3x256xbf16, #tpu.memory_space<vmem>>, %arg3: memref<64x3xf32, #tpu.memory_space<vmem>>, %arg4: memref<64x1xf32, #tpu.memory_space<vmem>>, %arg5: memref<128x64xbf16, #tpu.memory_space<vmem>>, %arg6: memref<1x1x128x2xf32, #tpu.memory_space<vmem>>) attributes {dimension_semantics = [#tpu.dimension_semantics<parallel>, #tpu.dimension_semantics<parallel>], iteration_bounds = array<i64: 2, 1>, scalar_prefetch = 0 : i64, scratch_operands = 0 : i64, tpu.core_type = #tpu.core_type<tc>, window_params = [{transform_indices = @transform_0, window_bounds = array<i64: 1, 3, 256>}, {pipeline_mode = #tpu.pipeline_mode<synchronous>, transform_indices = @transform_1, window_bounds = array<i64: 64, 3>}, {pipeline_mode = #tpu.pipeline_mode<synchronous>, transform_indices = @transform_2, window_bounds = array<i64: 64, 1>}, {pipeline_mode = #tpu.pipeline_mode<synchronous>, transform_indices = @transform_3, window_bounds = array<i64: 128, 64>}, {transform_indices = @transform_4, window_bounds = array<i64: 1, 1, 128, 2>}]} {
    %c0 = arith.constant 0 : index
    %c0_0 = arith.constant 0 : index
    %c0_1 = arith.constant 0 : index
    %0 = vector.load %arg2[%c0, %c0_0, %c0_1] : memref<1x3x256xbf16, #tpu.memory_space<vmem>>, vector<1x3x256xbf16>
    %1 = vector.shape_cast %0 : vector<1x3x256xbf16> to vector<3x256xbf16>
    %2 = arith.extf %1 : vector<3x256xbf16> to vector<3x256xf32>
    %c0_2 = arith.constant 0 : index
    %c0_3 = arith.constant 0 : index
    %3 = vector.load %arg3[%c0_2, %c0_3] : memref<64x3xf32, #tpu.memory_space<vmem>>, vector<64x3xf32>
    %4 = vector.extract_strided_slice %3 {offsets = [0, 0], sizes = [64, 1], strides = [1, 1]} : vector<64x3xf32> to vector<64x1xf32>
    %5 = vector.extract_strided_slice %2 {offsets = [0, 0], sizes = [1, 256], strides = [1, 1]} : vector<3x256xf32> to vector<1x256xf32>
    %6 = vector.broadcast %4 : vector<64x1xf32> to vector<64x256xf32>
    %7 = vector.broadcast %5 : vector<1x256xf32> to vector<64x256xf32>
    %8 = arith.mulf %6, %7 : vector<64x256xf32>
    %c0_4 = arith.constant 0 : index
    %c0_5 = arith.constant 0 : index
    %9 = vector.load %arg4[%c0_4, %c0_5] : memref<64x1xf32, #tpu.memory_space<vmem>>, vector<64x1xf32>
    %10 = vector.broadcast %9 : vector<64x1xf32> to vector<64x256xf32>
    %11 = arith.addf %8, %10 : vector<64x256xf32>
    %12 = vector.extract_strided_slice %3 {offsets = [0, 1], sizes = [64, 1], strides = [1, 1]} : vector<64x3xf32> to vector<64x1xf32>
    %13 = vector.extract_strided_slice %2 {offsets = [1, 0], sizes = [1, 256], strides = [1, 1]} : vector<3x256xf32> to vector<1x256xf32>
    %14 = vector.broadcast %12 : vector<64x1xf32> to vector<64x256xf32>
    %15 = vector.broadcast %13 : vector<1x256xf32> to vector<64x256xf32>
    %16 = arith.mulf %14, %15 : vector<64x256xf32>
    %17 = arith.addf %11, %16 : vector<64x256xf32>
    %18 = vector.extract_strided_slice %3 {offsets = [0, 2], sizes = [64, 1], strides = [1, 1]} : vector<64x3xf32> to vector<64x1xf32>
    %19 = vector.extract_strided_slice %2 {offsets = [2, 0], sizes = [1, 256], strides = [1, 1]} : vector<3x256xf32> to vector<1x256xf32>
    %20 = vector.broadcast %18 : vector<64x1xf32> to vector<64x256xf32>
    %21 = vector.broadcast %19 : vector<1x256xf32> to vector<64x256xf32>
    %22 = arith.mulf %20, %21 : vector<64x256xf32>
    %23 = arith.addf %17, %22 : vector<64x256xf32>
    %cst = arith.constant 0.000000e+00 : f32
    %24 = vector.broadcast %cst : f32 to vector<64x256xf32>
    %25 = arith.cmpf ogt, %23, %24 : vector<64x256xf32>
    %cst_6 = arith.constant 2.000000e-01 : f32
    %26 = vector.broadcast %cst_6 : f32 to vector<64x256xf32>
    %27 = arith.mulf %26, %23 : vector<64x256xf32>
    %28 = arith.select %25, %23, %27 : vector<64x256xi1>, vector<64x256xf32>
    %c0_7 = arith.constant 0 : index
    %c0_8 = arith.constant 0 : index
    %29 = vector.load %arg5[%c0_7, %c0_8] : memref<128x64xbf16, #tpu.memory_space<vmem>>, vector<128x64xbf16>
    %30 = arith.truncf %28 : vector<64x256xf32> to vector<64x256xbf16>
    %cst_9 = arith.constant dense<0.000000e+00> : vector<128x256xf32>
    %31 = tpu.matmul %29, %30, %cst_9 {dimension_numbers = #tpu.dot_dimension_numbers<[1], [0], [0], [1], [0, 0, 1, 1], [], []>} : vector<128x64xbf16>, vector<64x256xbf16>, vector<128x256xf32> -> vector<128x256xf32>
    %cst_10 = arith.constant dense<0.000000e+00> : vector<128xf32>
    %32 = vector.multi_reduction <add>, %31, %cst_10 [1] : vector<128x256xf32> to vector<128xf32>
    %33 = vector.shape_cast %32 : vector<128xf32> to vector<128x1xf32>
    %c0_11 = arith.constant 0 : index
    %c0_12 = arith.constant 0 : index
    %c0_13 = arith.constant 0 : index
    %c0_14 = arith.constant 0 : index
    %34 = vector.load %arg6[%c0_11, %c0_12, %c0_13, %c0_14] : memref<1x1x128x2xf32, #tpu.memory_space<vmem>>, vector<1x1x128x1xf32>
    %35 = vector.shape_cast %34 : vector<1x1x128x1xf32> to vector<128x1xf32>
    %36 = vector.shape_cast %33 : vector<128x1xf32> to vector<1x1x128x1xf32>
    tpu.vector_store %arg6[%c0_11, %c0_12, %c0_13, %c0_14], %36 {strides = array<i32>} : memref<1x1x128x2xf32, #tpu.memory_space<vmem>>, vector<1x1x128x1xf32>,
    %37 = arith.mulf %31, %31 : vector<128x256xf32>
    %cst_15 = arith.constant dense<0.000000e+00> : vector<128xf32>
    %38 = vector.multi_reduction <add>, %37, %cst_15 [1] : vector<128x256xf32> to vector<128xf32>
    %39 = vector.shape_cast %38 : vector<128xf32> to vector<128x1xf32>
    %c0_16 = arith.constant 0 : index
    %c0_17 = arith.constant 0 : index
    %c0_18 = arith.constant 0 : index
    %c1 = arith.constant 1 : index
    %40 = vector.load %arg6[%c0_16, %c0_17, %c0_18, %c1] : memref<1x1x128x2xf32, #tpu.memory_space<vmem>>, vector<1x1x128x1xf32>
    %41 = vector.shape_cast %40 : vector<1x1x128x1xf32> to vector<128x1xf32>
    %42 = vector.shape_cast %39 : vector<128x1xf32> to vector<1x1x128x1xf32>
    tpu.vector_store %arg6[%c0_16, %c0_17, %c0_18, %c1], %42 {strides = array<i32>} : memref<1x1x128x2xf32, #tpu.memory_space<vmem>>, vector<1x1x128x1xf32>,
    return
  }
  func.func @transform_0(%arg0: i32, %arg1: i32) -> (i32, i32, i32) {
    %c0_i32 = arith.constant 0 : i32
    %c0_i32_0 = arith.constant 0 : i32
    return %arg0, %c0_i32, %arg1 : i32, i32, i32
  }
  func.func @transform_1(%arg0: i32, %arg1: i32) -> (i32, i32) {
    %c0_i32 = arith.constant 0 : i32
    %c0_i32_0 = arith.constant 0 : i32
    %c0_i32_1 = arith.constant 0 : i32
    return %c0_i32, %c0_i32_0 : i32, i32
  }
  func.func @transform_2(%arg0: i32, %arg1: i32) -> (i32, i32) {
    %c0_i32 = arith.constant 0 : i32
    %c0_i32_0 = arith.constant 0 : i32
    %c0_i32_1 = arith.constant 0 : i32
    return %c0_i32, %c0_i32_0 : i32, i32
  }
  func.func @transform_3(%arg0: i32, %arg1: i32) -> (i32, i32) {
    %c0_i32 = arith.constant 0 : i32
    %c0_i32_0 = arith.constant 0 : i32
    %c0_i32_1 = arith.constant 0 : i32
    return %c0_i32, %c0_i32_0 : i32, i32
  }
  func.func @transform_4(%arg0: i32, %arg1: i32) -> (i32, i32, i32, i32) {
    %c0_i32 = arith.constant 0 : i32
    %c0_i32_0 = arith.constant 0 : i32
    %c0_i32_1 = arith.constant 0 : i32
    return %arg0, %arg1, %c0_i32, %c0_i32_0 : i32, i32, i32, i32
  }
}

module attributes {stable_mosaic.version = 11 : i64} {
  func.func @_apply_kernel(%arg0: i32, %arg1: i32, %arg2: memref<1x3x256xbf16, #tpu.memory_space<vmem>>, %arg3: memref<64x3xf32, #tpu.memory_space<vmem>>, %arg4: memref<64x1xf32, #tpu.memory_space<vmem>>, %arg5: memref<128x64xbf16, #tpu.memory_space<vmem>>, %arg6: memref<128x1xf32, #tpu.memory_space<vmem>>, %arg7: memref<128x1xf32, #tpu.memory_space<vmem>>, %arg8: memref<1x1xf32, #tpu.memory_space<vmem>>, %arg9: memref<1x1x256xf32, #tpu.memory_space<vmem>>, %arg10: memref<1x1x256xf32, #tpu.memory_space<vmem>>) attributes {dimension_semantics = [#tpu.dimension_semantics<parallel>, #tpu.dimension_semantics<parallel>], iteration_bounds = array<i64: 2, 1>, scalar_prefetch = 0 : i64, scratch_operands = 0 : i64, tpu.core_type = #tpu.core_type<tc>, window_params = [{transform_indices = @transform_0, window_bounds = array<i64: 1, 3, 256>}, {pipeline_mode = #tpu.pipeline_mode<synchronous>, transform_indices = @transform_1, window_bounds = array<i64: 64, 3>}, {pipeline_mode = #tpu.pipeline_mode<synchronous>, transform_indices = @transform_2, window_bounds = array<i64: 64, 1>}, {pipeline_mode = #tpu.pipeline_mode<synchronous>, transform_indices = @transform_3, window_bounds = array<i64: 128, 64>}, {pipeline_mode = #tpu.pipeline_mode<synchronous>, transform_indices = @transform_4, window_bounds = array<i64: 128, 1>}, {pipeline_mode = #tpu.pipeline_mode<synchronous>, transform_indices = @transform_5, window_bounds = array<i64: 128, 1>}, {pipeline_mode = #tpu.pipeline_mode<synchronous>, transform_indices = @transform_6, window_bounds = array<i64: 1, 1>}, {transform_indices = @transform_7, window_bounds = array<i64: 1, 1, 256>}, {transform_indices = @transform_8, window_bounds = array<i64: 1, 1, 256>}]} {
    %c0 = arith.constant 0 : index
    %c0_0 = arith.constant 0 : index
    %c0_1 = arith.constant 0 : index
    %0 = vector.load %arg2[%c0, %c0_0, %c0_1] : memref<1x3x256xbf16, #tpu.memory_space<vmem>>, vector<1x3x256xbf16>
    %1 = vector.shape_cast %0 : vector<1x3x256xbf16> to vector<3x256xbf16>
    %2 = arith.extf %1 : vector<3x256xbf16> to vector<3x256xf32>
    %c0_2 = arith.constant 0 : index
    %c0_3 = arith.constant 0 : index
    %3 = vector.load %arg3[%c0_2, %c0_3] : memref<64x3xf32, #tpu.memory_space<vmem>>, vector<64x3xf32>
    %4 = vector.extract_strided_slice %3 {offsets = [0, 0], sizes = [64, 1], strides = [1, 1]} : vector<64x3xf32> to vector<64x1xf32>
    %5 = vector.extract_strided_slice %2 {offsets = [0, 0], sizes = [1, 256], strides = [1, 1]} : vector<3x256xf32> to vector<1x256xf32>
    %6 = vector.broadcast %4 : vector<64x1xf32> to vector<64x256xf32>
    %7 = vector.broadcast %5 : vector<1x256xf32> to vector<64x256xf32>
    %8 = arith.mulf %6, %7 : vector<64x256xf32>
    %c0_4 = arith.constant 0 : index
    %c0_5 = arith.constant 0 : index
    %9 = vector.load %arg4[%c0_4, %c0_5] : memref<64x1xf32, #tpu.memory_space<vmem>>, vector<64x1xf32>
    %10 = vector.broadcast %9 : vector<64x1xf32> to vector<64x256xf32>
    %11 = arith.addf %8, %10 : vector<64x256xf32>
    %12 = vector.extract_strided_slice %3 {offsets = [0, 1], sizes = [64, 1], strides = [1, 1]} : vector<64x3xf32> to vector<64x1xf32>
    %13 = vector.extract_strided_slice %2 {offsets = [1, 0], sizes = [1, 256], strides = [1, 1]} : vector<3x256xf32> to vector<1x256xf32>
    %14 = vector.broadcast %12 : vector<64x1xf32> to vector<64x256xf32>
    %15 = vector.broadcast %13 : vector<1x256xf32> to vector<64x256xf32>
    %16 = arith.mulf %14, %15 : vector<64x256xf32>
    %17 = arith.addf %11, %16 : vector<64x256xf32>
    %18 = vector.extract_strided_slice %3 {offsets = [0, 2], sizes = [64, 1], strides = [1, 1]} : vector<64x3xf32> to vector<64x1xf32>
    %19 = vector.extract_strided_slice %2 {offsets = [2, 0], sizes = [1, 256], strides = [1, 1]} : vector<3x256xf32> to vector<1x256xf32>
    %20 = vector.broadcast %18 : vector<64x1xf32> to vector<64x256xf32>
    %21 = vector.broadcast %19 : vector<1x256xf32> to vector<64x256xf32>
    %22 = arith.mulf %20, %21 : vector<64x256xf32>
    %23 = arith.addf %17, %22 : vector<64x256xf32>
    %cst = arith.constant 0.000000e+00 : f32
    %24 = vector.broadcast %cst : f32 to vector<64x256xf32>
    %25 = arith.cmpf ogt, %23, %24 : vector<64x256xf32>
    %cst_6 = arith.constant 2.000000e-01 : f32
    %26 = vector.broadcast %cst_6 : f32 to vector<64x256xf32>
    %27 = arith.mulf %26, %23 : vector<64x256xf32>
    %28 = arith.select %25, %23, %27 : vector<64x256xi1>, vector<64x256xf32>
    %c0_7 = arith.constant 0 : index
    %c0_8 = arith.constant 0 : index
    %29 = vector.load %arg5[%c0_7, %c0_8] : memref<128x64xbf16, #tpu.memory_space<vmem>>, vector<128x64xbf16>
    %30 = arith.truncf %28 : vector<64x256xf32> to vector<64x256xbf16>
    %cst_9 = arith.constant dense<0.000000e+00> : vector<128x256xf32>
    %31 = tpu.matmul %29, %30, %cst_9 {dimension_numbers = #tpu.dot_dimension_numbers<[1], [0], [0], [1], [0, 0, 1, 1], [], []>} : vector<128x64xbf16>, vector<64x256xbf16>, vector<128x256xf32> -> vector<128x256xf32>
    %c0_10 = arith.constant 0 : index
    %c0_11 = arith.constant 0 : index
    %32 = vector.load %arg6[%c0_10, %c0_11] : memref<128x1xf32, #tpu.memory_space<vmem>>, vector<128x1xf32>
    %33 = vector.broadcast %32 : vector<128x1xf32> to vector<128x256xf32>
    %34 = arith.addf %31, %33 : vector<128x256xf32>
    %cst_12 = arith.constant 0.000000e+00 : f32
    %35 = vector.broadcast %cst_12 : f32 to vector<128x256xf32>
    %36 = arith.cmpf ogt, %34, %35 : vector<128x256xf32>
    %cst_13 = arith.constant 2.000000e-01 : f32
    %37 = vector.broadcast %cst_13 : f32 to vector<128x256xf32>
    %38 = arith.mulf %37, %34 : vector<128x256xf32>
    %39 = arith.select %36, %34, %38 : vector<128x256xi1>, vector<128x256xf32>
    %c0_14 = arith.constant 0 : index
    %c0_15 = arith.constant 0 : index
    %40 = vector.load %arg7[%c0_14, %c0_15] : memref<128x1xf32, #tpu.memory_space<vmem>>, vector<128x1xf32>
    %41 = vector.broadcast %40 : vector<128x1xf32> to vector<128x256xf32>
    %42 = arith.mulf %39, %41 : vector<128x256xf32>
    %cst_16 = arith.constant dense<0.000000e+00> : vector<256xf32>
    %43 = vector.multi_reduction <add>, %42, %cst_16 [0] : vector<128x256xf32> to vector<256xf32>
    %44 = vector.shape_cast %43 : vector<256xf32> to vector<1x256xf32>
    %c0_17 = arith.constant 0 : index
    %c0_18 = arith.constant 0 : index
    %45 = vector.load %arg8[%c0_17, %c0_18] : memref<1x1xf32, #tpu.memory_space<vmem>>, vector<1x1xf32>
    %46 = vector.broadcast %45 : vector<1x1xf32> to vector<1x256xf32>
    %47 = arith.addf %44, %46 : vector<1x256xf32>
    %c0_19 = arith.constant 0 : index
    %c0_20 = arith.constant 0 : index
    %c0_21 = arith.constant 0 : index
    %48 = vector.load %arg10[%c0_19, %c0_20, %c0_21] : memref<1x1x256xf32, #tpu.memory_space<vmem>>, vector<1x1x256xf32>
    %49 = vector.shape_cast %48 : vector<1x1x256xf32> to vector<1x256xf32>
    %50 = vector.shape_cast %47 : vector<1x256xf32> to vector<1x1x256xf32>
    tpu.vector_store %arg10[%c0_19, %c0_20, %c0_21], %50 {strides = array<i32>} : memref<1x1x256xf32, #tpu.memory_space<vmem>>, vector<1x1x256xf32>,
    %cst_22 = arith.constant 0.000000e+00 : f32
    %51 = vector.broadcast %cst_22 : f32 to vector<1x256xf32>
    %52 = arith.subf %51, %47 : vector<1x256xf32>
    %53 = math.exp %52 : vector<1x256xf32>
    %cst_23 = arith.constant 1.000000e+00 : f32
    %54 = vector.broadcast %cst_23 : f32 to vector<1x256xf32>
    %55 = arith.addf %54, %53 : vector<1x256xf32>
    %56 = tpu.reciprocal %55 {approx = true} : vector<1x256xf32> -> vector<1x256xf32>
    %c0_24 = arith.constant 0 : index
    %c0_25 = arith.constant 0 : index
    %c0_26 = arith.constant 0 : index
    %57 = vector.load %arg9[%c0_24, %c0_25, %c0_26] : memref<1x1x256xf32, #tpu.memory_space<vmem>>, vector<1x1x256xf32>
    %58 = vector.shape_cast %57 : vector<1x1x256xf32> to vector<1x256xf32>
    %59 = vector.shape_cast %56 : vector<1x256xf32> to vector<1x1x256xf32>
    tpu.vector_store %arg9[%c0_24, %c0_25, %c0_26], %59 {strides = array<i32>} : memref<1x1x256xf32, #tpu.memory_space<vmem>>, vector<1x1x256xf32>,
    return
  }
  func.func @transform_0(%arg0: i32, %arg1: i32) -> (i32, i32, i32) {
    %c0_i32 = arith.constant 0 : i32
    %c0_i32_0 = arith.constant 0 : i32
    return %arg0, %c0_i32, %arg1 : i32, i32, i32
  }
  func.func @transform_1(%arg0: i32, %arg1: i32) -> (i32, i32) {
    %c0_i32 = arith.constant 0 : i32
    %c0_i32_0 = arith.constant 0 : i32
    %c0_i32_1 = arith.constant 0 : i32
    return %c0_i32, %c0_i32_0 : i32, i32
  }
  func.func @transform_2(%arg0: i32, %arg1: i32) -> (i32, i32) {
    %c0_i32 = arith.constant 0 : i32
    %c0_i32_0 = arith.constant 0 : i32
    %c0_i32_1 = arith.constant 0 : i32
    return %c0_i32, %c0_i32_0 : i32, i32
  }
  func.func @transform_3(%arg0: i32, %arg1: i32) -> (i32, i32) {
    %c0_i32 = arith.constant 0 : i32
    %c0_i32_0 = arith.constant 0 : i32
    %c0_i32_1 = arith.constant 0 : i32
    return %c0_i32, %c0_i32_0 : i32, i32
  }
  func.func @transform_4(%arg0: i32, %arg1: i32) -> (i32, i32) {
    %c0_i32 = arith.constant 0 : i32
    %c0_i32_0 = arith.constant 0 : i32
    %c0_i32_1 = arith.constant 0 : i32
    return %c0_i32, %c0_i32_0 : i32, i32
  }
  func.func @transform_5(%arg0: i32, %arg1: i32) -> (i32, i32) {
    %c0_i32 = arith.constant 0 : i32
    %c0_i32_0 = arith.constant 0 : i32
    %c0_i32_1 = arith.constant 0 : i32
    return %c0_i32, %c0_i32_0 : i32, i32
  }
  func.func @transform_6(%arg0: i32, %arg1: i32) -> (i32, i32) {
    %c0_i32 = arith.constant 0 : i32
    %c0_i32_0 = arith.constant 0 : i32
    %c0_i32_1 = arith.constant 0 : i32
    return %c0_i32, %c0_i32_0 : i32, i32
  }
  func.func @transform_7(%arg0: i32, %arg1: i32) -> (i32, i32, i32) {
    %c0_i32 = arith.constant 0 : i32
    %c0_i32_0 = arith.constant 0 : i32
    return %arg0, %c0_i32, %arg1 : i32, i32, i32
  }
  func.func @transform_8(%arg0: i32, %arg1: i32) -> (i32, i32, i32) {
    %c0_i32 = arith.constant 0 : i32
    %c0_i32_0 = arith.constant 0 : i32
    return %arg0, %c0_i32, %arg1 : i32, i32, i32
  }
}

</mosaic_0001>

<llo_original>
// kernel: pixelgan_forward.2
$region0: #{pixelgan_forward.2}
  #allocation0 [shape = 'u32[]', space=smem, size = 0x4, offset = 0x4, fixed_abs, tag = 'smem constant byte address 0x4 - core index']
  #allocation1 [shape = 'u32[144,128]{1,0:T(1,128)}', space=vmem, size = 0x12000, scoped, tag = 'internal scratch']
  %s0 = inlined_call_operand.vmem [shape: bf16[2,3,256], index: 0, kind: input, shape index: {}]
  %s1 = inlined_call_operand.vmem [shape: f32[64,3], index: 1, kind: input, shape index: {}]
  %s2 = inlined_call_operand.vmem [shape: f32[64,1], index: 2, kind: input, shape index: {}]
  %s3 = inlined_call_operand.vmem [shape: bf16[128,64], index: 3, kind: input, shape index: {}]
  %s4 = inlined_call_operand.vmem [shape: f32[2,1,128,2], index: 4, kind: output, shape index: {}]
  %s5 = sld [smem:[#allocation0]]
  $region49: #{pixelgan_forward.2} parent=0
    _
  %s7 = ssub.s32 1, %s5
  %s8 = scalar_select 0, %s7, %s5
  loop: start=0, step=1, limit=4
  $region2: #{pixelgan_forward.2} parent=0 // loop_pre_header
    _
  $region3: #{pixelgan_forward.2} parent=0 // loop_header
    %s10 = sphi 0, %s14
    %p11 = scmp.ge.s32.totalorder %s10, 4
    %s17 = sphi 0, %s29
    %s18 = sphi 0, %s25
    %s19 = sphi 0, %s17
    %s20 = sphi 0, %s18
    %s21 = sphi 0, %s19
    %s22 = sphi 0, %s20
    %s34 = sphi 0, %s36
    %s37 = sphi 0, %s34
    %s38 = sphi 0, %s37
    %s54 = sphi 0, %s38
    %s58 = sphi 0, %s58
    %s60 = sphi 0, %s58
    %s61 = sphi 0, %s60
    %s75 = sphi 0, %s61
    %s79 = sphi 0, %s79
    %s81 = sphi 0, %s79
    %s82 = sphi 0, %s81
    %s96 = sphi 0, %s82
    %s100 = sphi 0, %s100
    %s102 = sphi 0, %s100
    %s103 = sphi 0, %s102
    %s117 = sphi 0, %s103
    %s125 = sphi 0, %s127
    %s128 = sphi 0, %s125
    %s129 = sphi 0, %s128
    %s145 = sphi 0, %s129
  $region4: #{pixelgan_forward.2} parent=0 // loop_header_branch
    %13 = sbr.rel (%p11) target = $region8
  $region5: #{pixelgan_forward.2} parent=0 // loop_body
    %s15 = ssub.s32 %s10, 1
    %s16 = ssub.s32 %s10, 2
    %s23 = sadd.s32 1, %s18
    %p24 = scmp.ge.s32.totalorder %s23, 1
    %s25 = scalar_select %p24, 0, %s23
    %s26 = sadd.s32 1, %s17
    %s27 = scalar_select %p24, %s26, %s17
    %p28 = scmp.ge.s32.totalorder %s27, 2
    %s29 = scalar_select %p28, 0, %s27
    %s30 = ssub.s32 %s17, %s29
    %s31 = ssub.s32 %s18, %s25
    %s32 = sor.u32 %s30, %s31
    %p33 = scmp.eq.s32.totalorder %s32, 0
    %s35 = sadd.s32 %s34, 1
    %s36 = scalar_select %p33, %s34, %s35
    %p39 = pneg %p33
    %p40 = scmp.eq.s32.totalorder %s10, 1
    %p41 = por %p39, %p40
    %p42 = scmp.ne.s32.totalorder %s34, %s37
    %p43 = scmp.eq.s32.totalorder %s10, 0
    %p44 = por %p42, %p43
    %p45 = scmp.ne.s32.totalorder %s34, %s37
    %p46 = scmp.eq.s32.totalorder %s15, 1
    %p47 = por %p45, %p46
    %p48 = scmp.ne.s32.totalorder %s37, %s38
    %p49 = scmp.eq.s32.totalorder %s15, 0
    %p50 = por %p48, %p49
    %p51 = scmp.ne.s32.totalorder %s37, %s38
    %p52 = scmp.eq.s32.totalorder %s16, 1
    %p53 = por %p51, %p52
    %p55 = scmp.ne.s32.totalorder %s38, %s54
    %p56 = scmp.eq.s32.totalorder %s16, 0
    %p57 = por %p55, %p56
    %s59 = sadd.s32 %s58, 1
    %p62 = scmp.eq.s32.totalorder %s10, 1
    %p63 = scmp.ne.s32.totalorder %s58, %s60
    %p64 = scmp.eq.s32.totalorder %s10, 0
    %p65 = por %p63, %p64
    %p66 = scmp.ne.s32.totalorder %s58, %s60
    %p67 = scmp.eq.s32.totalorder %s15, 1
    %p68 = por %p66, %p67
    %p69 = scmp.ne.s32.totalorder %s60, %s61
    %p70 = scmp.eq.s32.totalorder %s15, 0
    %p71 = por %p69, %p70
    %p72 = scmp.ne.s32.totalorder %s60, %s61
    %p73 = scmp.eq.s32.totalorder %s16, 1
    %p74 = por %p72, %p73
    %p76 = scmp.ne.s32.totalorder %s61, %s75
    %p77 = scmp.eq.s32.totalorder %s16, 0
    %p78 = por %p76, %p77
    %s80 = sadd.s32 %s79, 1
    %p83 = scmp.eq.s32.totalorder %s10, 1
    %p84 = scmp.ne.s32.totalorder %s79, %s81
    %p85 = scmp.eq.s32.totalorder %s10, 0
    %p86 = por %p84, %p85
    %p87 = scmp.ne.s32.totalorder %s79, %s81
    %p88 = scmp.eq.s32.totalorder %s15, 1
    %p89 = por %p87, %p88
    %p90 = scmp.ne.s32.totalorder %s81, %s82
    %p91 = scmp.eq.s32.totalorder %s15, 0
    %p92 = por %p90, %p91
    %p93 = scmp.ne.s32.totalorder %s81, %s82
    %p94 = scmp.eq.s32.totalorder %s16, 1
    %p95 = por %p93, %p94
    %p97 = scmp.ne.s32.totalorder %s82, %s96
    %p98 = scmp.eq.s32.totalorder %s16, 0
    %p99 = por %p97, %p98
    %s101 = sadd.s32 %s100, 1
    %p104 = scmp.eq.s32.totalorder %s10, 1
    %p105 = scmp.ne.s32.totalorder %s100, %s102
    %p106 = scmp.eq.s32.totalorder %s10, 0
    %p107 = por %p105, %p106
    %p108 = scmp.ne.s32.totalorder %s100, %s102
    %p109 = scmp.eq.s32.totalorder %s15, 1
    %p110 = por %p108, %p109
    %p111 = scmp.ne.s32.totalorder %s102, %s103
    %p112 = scmp.eq.s32.totalorder %s15, 0
    %p113 = por %p111, %p112
    %p114 = scmp.ne.s32.totalorder %s102, %s103
    %p115 = scmp.eq.s32.totalorder %s16, 1
    %p116 = por %p114, %p115
    %p118 = scmp.ne.s32.totalorder %s103, %s117
    %p119 = scmp.eq.s32.totalorder %s16, 0
    %p120 = por %p118, %p119
    %s121 = ssub.s32 %s17, %s29
    %s122 = ssub.s32 %s18, %s25
    %s123 = sor.u32 %s121, %s122
    %p124 = scmp.eq.s32.totalorder %s123, 0
    %s126 = sadd.s32 %s125, 1
    %s127 = scalar_select %p124, %s125, %s126
    %p130 = pneg %p124
    %p131 = scmp.eq.s32.totalorder %s10, 1
    %p132 = por %p130, %p131
    %p133 = scmp.ne.s32.totalorder %s125, %s128
    %p134 = scmp.eq.s32.totalorder %s10, 0
    %p135 = por %p133, %p134
    %p136 = scmp.ne.s32.totalorder %s125, %s128
    %p137 = scmp.eq.s32.totalorder %s15, 1
    %p138 = por %p136, %p137
    %p139 = scmp.ne.s32.totalorder %s128, %s129
    %p140 = scmp.eq.s32.totalorder %s15, 0
    %p141 = por %p139, %p140
    %p142 = scmp.ne.s32.totalorder %s128, %s129
    %p143 = scmp.eq.s32.totalorder %s16, 1
    %p144 = por %p142, %p143
    %p146 = scmp.ne.s32.totalorder %s129, %s145
    %p147 = scmp.eq.s32.totalorder %s16, 0
    %p148 = por %p146, %p147
    %p149 = scmp.le.s32.totalorder 1, %s10
    %p150 = scmp.lt.s32.totalorder %s10, 3
    %p151 = pnand %p149, %p150
    %p152 = pneg %p151
    // Predicated region
    $region9: #{pixelgan_forward.2} parent=5 // pred_check
      _
    $region10: #{pixelgan_forward.2} parent=5 // pred_check_branch
      %154 = sbr.rel (%p151) target = $region12
    $region11: #{pixelgan_forward.2} parent=5 // pred_region
      %s155 = ssub.s32 %s10, 1
      // Predicated region
      $region13: #{pixelgan_forward.2} parent=11 // pred_check
        %p156 = pneg %p71
      $region14: #{pixelgan_forward.2} parent=11 // pred_check_branch
        %158 = sbr.rel (%p156) target = $region16
      $region15: #{pixelgan_forward.2} parent=11 // pred_region
        _
      $region16: #{pixelgan_forward.2} parent=11 // pred_fallthru
        _
      // Predicated region
      $region17: #{pixelgan_forward.2} parent=11 // pred_check
        %p159 = pneg %p92
      $region18: #{pixelgan_forward.2} parent=11 // pred_check_branch
        %161 = sbr.rel (%p159) target = $region20
      $region19: #{pixelgan_forward.2} parent=11 // pred_region
        _
      $region20: #{pixelgan_forward.2} parent=11 // pred_fallthru
        _
      // Predicated region
      $region21: #{pixelgan_forward.2} parent=11 // pred_check
        %p162 = pneg %p113
      $region22: #{pixelgan_forward.2} parent=11 // pred_check_branch
        %164 = sbr.rel (%p162) target = $region24
      $region23: #{pixelgan_forward.2} parent=11 // pred_region
        _
      $region24: #{pixelgan_forward.2} parent=11 // pred_fallthru
        _
    $region12: #{pixelgan_forward.2} parent=5 // pred_fallthru
      _
    %p165 = scmp.lt.s32.totalorder %s10, 2
    // Predicated region
    $region25: #{pixelgan_forward.2} parent=5 // pred_check
      %p166 = pneg %p165
    $region26: #{pixelgan_forward.2} parent=5 // pred_check_branch
      %168 = sbr.rel (%p166) target = $region28
    $region27: #{pixelgan_forward.2} parent=5 // pred_region
      // Predicated region
      $region29: #{pixelgan_forward.2} parent=27 // pred_check
        %p169 = pneg %p44
      $region30: #{pixelgan_forward.2} parent=27 // pred_check_branch
        %171 = sbr.rel (%p169) target = $region32
      $region31: #{pixelgan_forward.2} parent=27 // pred_region
        %s172 = smul.u32 2, %s18
        %p173 = scmp.lt.s32.totalorder %s17, 1
        %s174 = scalar_select %p173, %s17, 1
        %p175 = scmp.lt.s32.totalorder %s172, 1
        %s176 = scalar_select %p175, %s172, 1
        %s177 = smul.addr %s174, 2
        %s178 = sadd.s32 %s176, %s177
        %s179 = smul.addr %s178, 2
        %s180 = scalar_lea.vmem %s0, %s179
        %s181 = smul.u32 2, %s18
      $region32: #{pixelgan_forward.2} parent=27 // pred_fallthru
        _
    $region28: #{pixelgan_forward.2} parent=5 // pred_fallthru
      _
    %p182 = scmp.le.s32.totalorder 1, %s10
    %p183 = scmp.lt.s32.totalorder %s10, 3
    %p184 = pnand %p182, %p183
    %p185 = pneg %p184
    // Predicated region
    $region33: #{pixelgan_forward.2} parent=5 // pred_check
      _
    $region34: #{pixelgan_forward.2} parent=5 // pred_check_branch
      %187 = sbr.rel (%p184) target = $region36
    $region35: #{pixelgan_forward.2} parent=5 // pred_region
      %s188 = ssub.s32 %s10, 1
      %s189 = smul.u32 2, %s20
      %p190 = scmp.lt.s32.totalorder %s19, 1
      %s191 = scalar_select %p190, %s19, 1
      %p192 = scmp.lt.s32.totalorder %s189, 1
      %s193 = scalar_select %p192, %s189, 1
      %s194 = smul.addr %s191, 2
      %s195 = sadd.s32 %s193, %s194
      %s196 = smul.addr %s195, 2
      %s197 = scalar_lea.vmem %s0, %s196
      %p198 = pneg %p50
      %p199 = pneg %p47
      %p200 = pneg %p71
      %p201 = pneg %p68
      %p202 = pneg %p92
      %p203 = pneg %p89
      %p204 = pneg %p113
      %p205 = pneg %p110
      %p206 = pneg %p141
      %p207 = pneg %p138
      %p208 = scmp.lt.s32.totalorder %s19, 1
      %s209 = scalar_select %p208, %s19, 1
      %p210 = scmp.lt.s32.totalorder %s20, 0
      %s211 = scalar_select %p210, %s20, 0
      %s212 = smul.addr %s211, 16
      %s213 = smul.addr %s209, 16
      %s214 = sadd.s32 %s212, %s213
      %s215 = smul.addr %s214, 8
      %s216 = scalar_lea.vmem %s4, %s215
      %s217 = smul.u32 2, %s20
      %p218 = scmp.lt.s32.totalorder %s19, 1
      %s219 = scalar_select %p218, %s19, 1
      %p220 = scmp.lt.s32.totalorder %s217, 1
      %s221 = scalar_select %p220, %s217, 1
      %s222 = smul.addr %s219, 2
      %s223 = sadd.s32 %s221, %s222
      %s224 = smul.addr %s223, 2
      %s225 = scalar_lea.vmem %s0, %s224
      %s226 = smul.u32 2, %s20
      %p227 = scmp.lt.s32.totalorder %s19, 1
      %s228 = scalar_select %p227, %s19, 1
      %p229 = scmp.lt.s32.totalorder %s20, 0
      %s230 = scalar_select %p229, %s20, 0
      %s231 = smul.addr %s230, 16
      %s232 = smul.addr %s228, 16
      %s233 = sadd.s32 %s231, %s232
      %s234 = smul.addr %s233, 8
      %s235 = scalar_lea.vmem %s4, %s234
      %v237 = vld [vmem:[%s225] sm:$0xf]
      %v238 = vunpack.c.l.bf16 %v237
      %v239 = vld [vmem:[%s1] sm:$0xff]
      %v240 = vld [vmem:[%s1 + $0x8] sm:$0xff]
      %v241 = vld [vmem:[%s1 + $0x10] sm:$0xff]
      %v242 = vld [vmem:[%s1 + $0x18] sm:$0xff]
      %v243 = vld [vmem:[%s1 + $0x20] sm:$0xff]
      %v244 = vld [vmem:[%s1 + $0x28] sm:$0xff]
      %v245 = vld [vmem:[%s1 + $0x30] sm:$0xff]
      %v246 = vld [vmem:[%s1 + $0x38] sm:$0xff]
      %248 = vset.pattern.permute.xlu0 0
      %249 = vperm.xlu0 %248, %v239
      %v250 = vpop.permute.xlu0 %249
      %253 = vset.pattern.permute.xlu0 0
      %254 = vperm.xlu0 %253, %v240
      %v255 = vpop.permute.xlu0 %254
      %258 = vset.pattern.permute.xlu0 0
      %259 = vperm.xlu0 %258, %v241
      %v260 = vpop.permute.xlu0 %259
      %263 = vset.pattern.permute.xlu0 0
      %264 = vperm.xlu0 %263, %v242
      %v265 = vpop.permute.xlu0 %264
      %268 = vset.pattern.permute.xlu0 0
      %269 = vperm.xlu0 %268, %v243
      %v270 = vpop.permute.xlu0 %269
      %273 = vset.pattern.permute.xlu0 0
      %274 = vperm.xlu0 %273, %v244
      %v275 = vpop.permute.xlu0 %274
      %278 = vset.pattern.permute.xlu0 0
      %279 = vperm.xlu0 %278, %v245
      %v280 = vpop.permute.xlu0 %279
      %283 = vset.pattern.permute.xlu0 0
      %284 = vperm.xlu0 %283, %v246
      %v285 = vpop.permute.xlu0 %284
      %v288 = vlaneseq
      %v289 = vshrl.u32 %v288, 7
      %v290 = vsub.s32 0, %v289
      %v291 = vrot.slane %v238, %v290
      %v292 = vlaneseq
      %v293 = vshrl.u32 %v292, 7
      %v294 = vsub.s32 4, %v293
      %v295 = vrot.slane %v238, %v294
      %v298 = vlaneseq
      %v299 = vshrl.u32 %v298, 7
      %v300 = vsub.s32 0, %v299
      %v301 = vrot.slane %v291, %v300
      %v302 = vlaneseq
      %v303 = vshrl.u32 %v302, 7
      %v304 = vsub.s32 0, %v303
      %v305 = vrot.slane %v295, %v304
      %v306 = vmul.f32 %v250, %v301
      %v307 = vmul.f32 %v250, %v305
      %v308 = vmul.f32 %v255, %v301
      %v309 = vmul.f32 %v255, %v305
      %v310 = vmul.f32 %v260, %v301
      %v311 = vmul.f32 %v260, %v305
      %v312 = vmul.f32 %v265, %v301
      %v313 = vmul.f32 %v265, %v305
      %v314 = vmul.f32 %v270, %v301
      %v315 = vmul.f32 %v270, %v305
      %v316 = vmul.f32 %v275, %v301
      %v317 = vmul.f32 %v275, %v305
      %v318 = vmul.f32 %v280, %v301
      %v319 = vmul.f32 %v280, %v305
      %v320 = vmul.f32 %v285, %v301
      %v321 = vmul.f32 %v285, %v305
      %v322 = vld [vmem:[%s2] sm:$0xff]
      %v323 = vld [vmem:[%s2 + $0x8] sm:$0xff]
      %v324 = vld [vmem:[%s2 + $0x10] sm:$0xff]
      %v325 = vld [vmem:[%s2 + $0x18] sm:$0xff]
      %v326 = vld [vmem:[%s2 + $0x20] sm:$0xff]
      %v327 = vld [vmem:[%s2 + $0x28] sm:$0xff]
      %v328 = vld [vmem:[%s2 + $0x30] sm:$0xff]
      %v329 = vld [vmem:[%s2 + $0x38] sm:$0xff]
      %331 = vset.pattern.permute.xlu0 0
      %332 = vperm.xlu0 %331, %v322
      %v333 = vpop.permute.xlu0 %332
      %336 = vset.pattern.permute.xlu0 0
      %337 = vperm.xlu0 %336, %v323
      %v338 = vpop.permute.xlu0 %337
      %341 = vset.pattern.permute.xlu0 0
      %342 = vperm.xlu0 %341, %v324
      %v343 = vpop.permute.xlu0 %342
      %346 = vset.pattern.permute.xlu0 0
      %347 = vperm.xlu0 %346, %v325
      %v348 = vpop.permute.xlu0 %347
      %351 = vset.pattern.permute.xlu0 0
      %352 = vperm.xlu0 %351, %v326
      %v353 = vpop.permute.xlu0 %352
      %356 = vset.pattern.permute.xlu0 0
      %357 = vperm.xlu0 %356, %v327
      %v358 = vpop.permute.xlu0 %357
      %361 = vset.pattern.permute.xlu0 0
      %362 = vperm.xlu0 %361, %v328
      %v363 = vpop.permute.xlu0 %362
      %366 = vset.pattern.permute.xlu0 0
      %367 = vperm.xlu0 %366, %v329
      %v368 = vpop.permute.xlu0 %367
      %v370 = vadd.f32 %v306, %v333
      %v371 = vadd.f32 %v307, %v333
      %v372 = vadd.f32 %v308, %v338
      %v373 = vadd.f32 %v309, %v338
      %v374 = vadd.f32 %v310, %v343
      %v375 = vadd.f32 %v311, %v343
      %v376 = vadd.f32 %v312, %v348
      %v377 = vadd.f32 %v313, %v348
      %v378 = vadd.f32 %v314, %v353
      %v379 = vadd.f32 %v315, %v353
      %v380 = vadd.f32 %v316, %v358
      %v381 = vadd.f32 %v317, %v358
      %v382 = vadd.f32 %v318, %v363
      %v383 = vadd.f32 %v319, %v363
      %v384 = vadd.f32 %v320, %v368
      %v385 = vadd.f32 %v321, %v368
      %386 = vset.pattern.permute.xlu0 1
      %387 = vperm.xlu0 %386, %v239
      %v388 = vpop.permute.xlu0 %387
      %390 = vset.pattern.permute.xlu0 1
      %391 = vperm.xlu0 %390, %v240
      %v392 = vpop.permute.xlu0 %391
      %394 = vset.pattern.permute.xlu0 1
      %395 = vperm.xlu0 %394, %v241
      %v396 = vpop.permute.xlu0 %395
      %398 = vset.pattern.permute.xlu0 1
      %399 = vperm.xlu0 %398, %v242
      %v400 = vpop.permute.xlu0 %399
      %402 = vset.pattern.permute.xlu0 1
      %403 = vperm.xlu0 %402, %v243
      %v404 = vpop.permute.xlu0 %403
      %406 = vset.pattern.permute.xlu0 1
      %407 = vperm.xlu0 %406, %v244
      %v408 = vpop.permute.xlu0 %407
      %410 = vset.pattern.permute.xlu0 1
      %411 = vperm.xlu0 %410, %v245
      %v412 = vpop.permute.xlu0 %411
      %414 = vset.pattern.permute.xlu0 1
      %415 = vperm.xlu0 %414, %v246
      %v416 = vpop.permute.xlu0 %415
      %v418 = vlaneseq
      %v419 = vshrl.u32 %v418, 7
      %v420 = vsub.s32 1, %v419
      %v421 = vrot.slane %v238, %v420
      %v422 = vlaneseq
      %v423 = vshrl.u32 %v422, 7
      %v424 = vsub.s32 5, %v423
      %v425 = vrot.slane %v238, %v424
      %v428 = vlaneseq
      %v429 = vshrl.u32 %v428, 7
      %v430 = vsub.s32 1, %v429
      %v431 = vrot.slane %v421, %v430
      %v432 = vlaneseq
      %v433 = vshrl.u32 %v432, 7
      %v434 = vsub.s32 1, %v433
      %v435 = vrot.slane %v425, %v434
      %v436 = vmul.f32 %v388, %v431
      %v437 = vmul.f32 %v388, %v435
      %v438 = vmul.f32 %v392, %v431
      %v439 = vmul.f32 %v392, %v435
      %v440 = vmul.f32 %v396, %v431
      %v441 = vmul.f32 %v396, %v435
      %v442 = vmul.f32 %v400, %v431
      %v443 = vmul.f32 %v400, %v435
      %v444 = vmul.f32 %v404, %v431
      %v445 = vmul.f32 %v404, %v435
      %v446 = vmul.f32 %v408, %v431
      %v447 = vmul.f32 %v408, %v435
      %v448 = vmul.f32 %v412, %v431
      %v449 = vmul.f32 %v412, %v435
      %v450 = vmul.f32 %v416, %v431
      %v451 = vmul.f32 %v416, %v435
      %v452 = vadd.f32 %v370, %v436
      %v453 = vadd.f32 %v371, %v437
      %v454 = vadd.f32 %v372, %v438
      %v455 = vadd.f32 %v373, %v439
      %v456 = vadd.f32 %v374, %v440
      %v457 = vadd.f32 %v375, %v441
      %v458 = vadd.f32 %v376, %v442
      %v459 = vadd.f32 %v377, %v443
      %v460 = vadd.f32 %v378, %v444
      %v461 = vadd.f32 %v379, %v445
      %v462 = vadd.f32 %v380, %v446
      %v463 = vadd.f32 %v381, %v447
      %v464 = vadd.f32 %v382, %v448
      %v465 = vadd.f32 %v383, %v449
      %v466 = vadd.f32 %v384, %v450
      %v467 = vadd.f32 %v385, %v451
      %468 = vset.pattern.permute.xlu0 2
      %469 = vperm.xlu0 %468, %v239
      %v470 = vpop.permute.xlu0 %469
      %472 = vset.pattern.permute.xlu0 2
      %473 = vperm.xlu0 %472, %v240
      %v474 = vpop.permute.xlu0 %473
      %476 = vset.pattern.permute.xlu0 2
      %477 = vperm.xlu0 %476, %v241
      %v478 = vpop.permute.xlu0 %477
      %480 = vset.pattern.permute.xlu0 2
      %481 = vperm.xlu0 %480, %v242
      %v482 = vpop.permute.xlu0 %481
      %484 = vset.pattern.permute.xlu0 2
      %485 = vperm.xlu0 %484, %v243
      %v486 = vpop.permute.xlu0 %485
      %488 = vset.pattern.permute.xlu0 2
      %489 = vperm.xlu0 %488, %v244
      %v490 = vpop.permute.xlu0 %489
      %492 = vset.pattern.permute.xlu0 2
      %493 = vperm.xlu0 %492, %v245
      %v494 = vpop.permute.xlu0 %493
      %496 = vset.pattern.permute.xlu0 2
      %497 = vperm.xlu0 %496, %v246
      %v498 = vpop.permute.xlu0 %497
      %v500 = vlaneseq
      %v501 = vshrl.u32 %v500, 7
      %v502 = vsub.s32 2, %v501
      %v503 = vrot.slane %v238, %v502
      %v504 = vlaneseq
      %v505 = vshrl.u32 %v504, 7
      %v506 = vsub.s32 6, %v505
      %v507 = vrot.slane %v238, %v506
      %v510 = vlaneseq
      %v511 = vshrl.u32 %v510, 7
      %v512 = vsub.s32 2, %v511
      %v513 = vrot.slane %v503, %v512
      %v514 = vlaneseq
      %v515 = vshrl.u32 %v514, 7
      %v516 = vsub.s32 2, %v515
      %v517 = vrot.slane %v507, %v516
      %v518 = vmul.f32 %v470, %v513
      %v519 = vmul.f32 %v470, %v517
      %v520 = vmul.f32 %v474, %v513
      %v521 = vmul.f32 %v474, %v517
      %v522 = vmul.f32 %v478, %v513
      %v523 = vmul.f32 %v478, %v517
      %v524 = vmul.f32 %v482, %v513
      %v525 = vmul.f32 %v482, %v517
      %v526 = vmul.f32 %v486, %v513
      %v527 = vmul.f32 %v486, %v517
      %v528 = vmul.f32 %v490, %v513
      %v529 = vmul.f32 %v490, %v517
      %v530 = vmul.f32 %v494, %v513
      %v531 = vmul.f32 %v494, %v517
      %v532 = vmul.f32 %v498, %v513
      %v533 = vmul.f32 %v498, %v517
      %v534 = vadd.f32 %v452, %v518
      %v535 = vadd.f32 %v453, %v519
      %v536 = vadd.f32 %v454, %v520
      %v537 = vadd.f32 %v455, %v521
      %v538 = vadd.f32 %v456, %v522
      %v539 = vadd.f32 %v457, %v523
      %v540 = vadd.f32 %v458, %v524
      %v541 = vadd.f32 %v459, %v525
      %v542 = vadd.f32 %v460, %v526
      %v543 = vadd.f32 %v461, %v527
      %v544 = vadd.f32 %v462, %v528
      %v545 = vadd.f32 %v463, %v529
      %v546 = vadd.f32 %v464, %v530
      %v547 = vadd.f32 %v465, %v531
      %v548 = vadd.f32 %v466, %v532
      %v549 = vadd.f32 %v467, %v533
      %vm550 = vcmp.gt.f32.partialorder %v534, 0.0
      %vm551 = vcmp.gt.f32.partialorder %v535, 0.0
      %vm552 = vcmp.gt.f32.partialorder %v536, 0.0
      %vm553 = vcmp.gt.f32.partialorder %v537, 0.0
      %vm554 = vcmp.gt.f32.partialorder %v538, 0.0
      %vm555 = vcmp.gt.f32.partialorder %v539, 0.0
      %vm556 = vcmp.gt.f32.partialorder %v540, 0.0
      %vm557 = vcmp.gt.f32.partialorder %v541, 0.0
      %vm558 = vcmp.gt.f32.partialorder %v542, 0.0
      %vm559 = vcmp.gt.f32.partialorder %v543, 0.0
      %vm560 = vcmp.gt.f32.partialorder %v544, 0.0
      %vm561 = vcmp.gt.f32.partialorder %v545, 0.0
      %vm562 = vcmp.gt.f32.partialorder %v546, 0.0
      %vm563 = vcmp.gt.f32.partialorder %v547, 0.0
      %vm564 = vcmp.gt.f32.partialorder %v548, 0.0
      %vm565 = vcmp.gt.f32.partialorder %v549, 0.0
      %v566 = vmul.f32 %v534, 0.2
      %v567 = vmul.f32 %v535, 0.2
      %v568 = vmul.f32 %v536, 0.2
      %v569 = vmul.f32 %v537, 0.2
      %v570 = vmul.f32 %v538, 0.2
      %v571 = vmul.f32 %v539, 0.2
      %v572 = vmul.f32 %v540, 0.2
      %v573 = vmul.f32 %v541, 0.2
      %v574 = vmul.f32 %v542, 0.2
      %v575 = vmul.f32 %v543, 0.2
      %v576 = vmul.f32 %v544, 0.2
      %v577 = vmul.f32 %v545, 0.2
      %v578 = vmul.f32 %v546, 0.2
      %v579 = vmul.f32 %v547, 0.2
      %v580 = vmul.f32 %v548, 0.2
      %v581 = vmul.f32 %v549, 0.2
      %v582 = vsel %vm550, %v534, %v566
      %v583 = vsel %vm551, %v535, %v567
      %v584 = vsel %vm552, %v536, %v568
      %v585 = vsel %vm553, %v537, %v569
      %v586 = vsel %vm554, %v538, %v570
      %v587 = vsel %vm555, %v539, %v571
      %v588 = vsel %vm556, %v540, %v572
      %v589 = vsel %vm557, %v541, %v573
      %v590 = vsel %vm558, %v542, %v574
      %v591 = vsel %vm559, %v543, %v575
      %v592 = vsel %vm560, %v544, %v576
      %v593 = vsel %vm561, %v545, %v577
      %v594 = vsel %vm562, %v546, %v578
      %v595 = vsel %vm563, %v547, %v579
      %v596 = vsel %vm564, %v548, %v580
      %v597 = vsel %vm565, %v549, %v581
      %v598 = vld [vmem:[%s3] sm:$0xf]
      %v599 = vld [vmem:[%s3 + $0x4] sm:$0xf]
      %v600 = vld [vmem:[%s3 + $0x8] sm:$0xf]
      %v601 = vld [vmem:[%s3 + $0xc] sm:$0xf]
      %v602 = vld [vmem:[%s3 + $0x10] sm:$0xf]
      %v603 = vld [vmem:[%s3 + $0x14] sm:$0xf]
      %v604 = vld [vmem:[%s3 + $0x18] sm:$0xf]
      %v605 = vld [vmem:[%s3 + $0x1c] sm:$0xf]
      %v606 = vld [vmem:[%s3 + $0x20] sm:$0xf]
      %v607 = vld [vmem:[%s3 + $0x24] sm:$0xf]
      %v608 = vld [vmem:[%s3 + $0x28] sm:$0xf]
      %v609 = vld [vmem:[%s3 + $0x2c] sm:$0xf]
      %v610 = vld [vmem:[%s3 + $0x30] sm:$0xf]
      %v611 = vld [vmem:[%s3 + $0x34] sm:$0xf]
      %v612 = vld [vmem:[%s3 + $0x38] sm:$0xf]
      %v613 = vld [vmem:[%s3 + $0x3c] sm:$0xf]
      %v614 = vpack.c.bf16 %v584, %v582
      %v615 = vpack.c.bf16 %v585, %v583
      %v616 = vpack.c.bf16 %v588, %v586
      %v617 = vpack.c.bf16 %v589, %v587
      %v618 = vpack.c.bf16 %v592, %v590
      %v619 = vpack.c.bf16 %v593, %v591
      %v620 = vpack.c.bf16 %v596, %v594
      %v621 = vpack.c.bf16 %v597, %v595
      %v638 = vunpack.c.l.b16 %v598
      %v639 = vunpack.c.l.b16 %v599
      %v640 = vunpack.c.l.b16 %v600
      %v641 = vunpack.c.l.b16 %v601
      %v642 = vunpack.c.l.b16 %v602
      %v643 = vunpack.c.l.b16 %v603
      %v644 = vunpack.c.l.b16 %v604
      %v645 = vunpack.c.l.b16 %v605
      %v646 = vunpack.c.l.b16 %v606
      %v647 = vunpack.c.l.b16 %v607
      %v648 = vunpack.c.l.b16 %v608
      %v649 = vunpack.c.l.b16 %v609
      %v650 = vunpack.c.l.b16 %v610
      %v651 = vunpack.c.l.b16 %v611
      %v652 = vunpack.c.l.b16 %v612
      %v653 = vunpack.c.l.b16 %v613
      %v654 = vpack.c.b16 %v639, %v638
      %v655 = vpack.c.b16 %v641, %v640
      %v656 = vpack.c.b16 %v643, %v642
      %v657 = vpack.c.b16 %v645, %v644
      %v658 = vpack.c.b16 %v647, %v646
      %v659 = vpack.c.b16 %v649, %v648
      %v660 = vpack.c.b16 %v651, %v650
      %v661 = vpack.c.b16 %v653, %v652
      %vm662 = vcmask 523264
      %v664 = vsel %vm662, %v654, 0
      %v667 = vsel %vm662, %v655, 0
      %v670 = vsel %vm662, %v656, 0
      %v673 = vsel %vm662, %v657, 0
      %v676 = vsel %vm662, %v658, 0
      %v679 = vsel %vm662, %v659, 0
      %v682 = vsel %vm662, %v660, 0
      %v685 = vsel %vm662, %v661, 0
      %687 = vmatprep.subr.bf16.mxu0 0
      %688 = vmatpush1.bf16.msra.mxu0 0
      %689 = vmatprep.subr.bf16.mxu0 0
      %690 = vmatpush1.bf16.msra.mxu0 0
      %691 = vmatprep.subr.bf16.mxu0 0
      %692 = vmatpush1.bf16.msra.mxu0 0
      %693 = vmatprep.subr.bf16.mxu0 0
      %694 = vmatpush1.bf16.msra.mxu0 0
      %695 = vmatprep.subr.bf16.mxu0 %v621
      %696 = vmatpush1.bf16.msra.mxu0 %v620
      %697 = vmatprep.subr.bf16.mxu0 %v619
      %698 = vmatpush1.bf16.msra.mxu0 %v618
      %699 = vmatprep.subr.bf16.mxu0 %v617
      %700 = vmatpush1.bf16.msra.mxu0 %v616
      %701 = vmatprep.subr.bf16.mxu0 %v615
      %702 = vmatpush1.bf16.msra.mxu0 %v614
      %703 = vmatprep.subr.bf16.mxu0 0
      %704 = vmatpush2.bf16.msra.mxu0 0
      %705 = vmatprep.subr.bf16.mxu0 0
      %706 = vmatpush2.bf16.msra.mxu0 0
      %707 = vmatprep.subr.bf16.mxu0 0
      %708 = vmatpush2.bf16.msra.mxu0 0
      %709 = vmatprep.subr.bf16.mxu0 0
      %710 = vmatpush2.bf16.msra.mxu0 0
      %711 = vmatprep.subr.bf16.mxu0 0
      %712 = vmatpush2.bf16.msra.mxu0 0
      %713 = vmatprep.subr.bf16.mxu0 0
      %714 = vmatpush2.bf16.msra.mxu0 0
      %715 = vmatprep.subr.bf16.mxu0 0
      %716 = vmatpush2.bf16.msra.mxu0 0
      %717 = vmatprep.subr.bf16.mxu0 0
      %718 = vmatpush2.bf16.msra.mxu0 0
      %719 = vmatprep.mubr.bf16.mxu0 0
      %720 = vmatmul.mubr.bf16.gmra.mxu0 %v664
      %v721 = vpop.f32.mrf.mxu0
      %v722 = vadd.f32 0.0, %v721
      %v723 = vpop.f32.mrf.mxu0
      %v724 = vadd.f32 0.0, %v723
      %v725 = vpop.f32.mrf.mxu0
      %v726 = vadd.f32 0.0, %v725
      %v727 = vpop.f32.mrf.mxu0
      %v728 = vadd.f32 0.0, %v727
      %729 = vmatprep.mubr.bf16.mxu0 0
      %730 = vmatmul.mubr.bf16.gmra.mxu0 %v667
      %v731 = vpop.f32.mrf.mxu0
      %v732 = vadd.f32 0.0, %v731
      %v733 = vpop.f32.mrf.mxu0
      %v734 = vadd.f32 0.0, %v733
      %v735 = vpop.f32.mrf.mxu0
      %v736 = vadd.f32 0.0, %v735
      %v737 = vpop.f32.mrf.mxu0
      %v738 = vadd.f32 0.0, %v737
      %739 = vmatprep.mubr.bf16.mxu0 0
      %740 = vmatmul.mubr.bf16.gmra.mxu0 %v670
      %v741 = vpop.f32.mrf.mxu0
      %v742 = vadd.f32 0.0, %v741
      %v743 = vpop.f32.mrf.mxu0
      %v744 = vadd.f32 0.0, %v743
      %v745 = vpop.f32.mrf.mxu0
      %v746 = vadd.f32 0.0, %v745
      %v747 = vpop.f32.mrf.mxu0
      %v748 = vadd.f32 0.0, %v747
      %749 = vmatprep.mubr.bf16.mxu0 0
      %750 = vmatmul.mubr.bf16.gmra.mxu0 %v673
      %v751 = vpop.f32.mrf.mxu0
      %v752 = vadd.f32 0.0, %v751
      %v753 = vpop.f32.mrf.mxu0
      %v754 = vadd.f32 0.0, %v753
      %v755 = vpop.f32.mrf.mxu0
      %v756 = vadd.f32 0.0, %v755
      %v757 = vpop.f32.mrf.mxu0
      %v758 = vadd.f32 0.0, %v757
      %759 = vmatprep.mubr.bf16.mxu0 0
      %760 = vmatmul.mubr.bf16.gmra.mxu0 %v676
      %v761 = vpop.f32.mrf.mxu0
      %v762 = vadd.f32 0.0, %v761
      %v763 = vpop.f32.mrf.mxu0
      %v764 = vadd.f32 0.0, %v763
      %v765 = vpop.f32.mrf.mxu0
      %v766 = vadd.f32 0.0, %v765
      %v767 = vpop.f32.mrf.mxu0
      %v768 = vadd.f32 0.0, %v767
      %769 = vmatprep.mubr.bf16.mxu0 0
      %770 = vmatmul.mubr.bf16.gmra.mxu0 %v679
      %v771 = vpop.f32.mrf.mxu0
      %v772 = vadd.f32 0.0, %v771
      %v773 = vpop.f32.mrf.mxu0
      %v774 = vadd.f32 0.0, %v773
      %v775 = vpop.f32.mrf.mxu0
      %v776 = vadd.f32 0.0, %v775
      %v777 = vpop.f32.mrf.mxu0
      %v778 = vadd.f32 0.0, %v777
      %779 = vmatprep.mubr.bf16.mxu0 0
      %780 = vmatmul.mubr.bf16.gmra.mxu0 %v682
      %v781 = vpop.f32.mrf.mxu0
      %v782 = vadd.f32 0.0, %v781
      %v783 = vpop.f32.mrf.mxu0
      %v784 = vadd.f32 0.0, %v783
      %v785 = vpop.f32.mrf.mxu0
      %v786 = vadd.f32 0.0, %v785
      %v787 = vpop.f32.mrf.mxu0
      %v788 = vadd.f32 0.0, %v787
      %789 = vmatprep.mubr.bf16.mxu0 0
      %790 = vmatmul.mubr.bf16.gmra.mxu0 %v685
      %v791 = vpop.f32.mrf.mxu0
      %v792 = vadd.f32 0.0, %v791
      %v793 = vpop.f32.mrf.mxu0
      %v794 = vadd.f32 0.0, %v793
      %v795 = vpop.f32.mrf.mxu0
      %v796 = vadd.f32 0.0, %v795
      %v797 = vpop.f32.mrf.mxu0
      %v798 = vadd.f32 0.0, %v797
      %799 = vdwg.mxu0
      %v800 = vadd.f32 %v722, %v724
      %801 = vadd.xlane.f32.xlu0 %v800
      %v802 = vpop.xlane.xlu0 %801
      %v803 = vadd.f32 %v726, %v728
      %804 = vadd.xlane.f32.xlu0 %v803
      %v805 = vpop.xlane.xlu0 %804
      %v806 = vadd.f32 %v732, %v734
      %807 = vadd.xlane.f32.xlu0 %v806
      %v808 = vpop.xlane.xlu0 %807
      %v809 = vadd.f32 %v736, %v738
      %810 = vadd.xlane.f32.xlu0 %v809
      %v811 = vpop.xlane.xlu0 %810
      %v812 = vadd.f32 %v742, %v744
      %813 = vadd.xlane.f32.xlu0 %v812
      %v814 = vpop.xlane.xlu0 %813
      %v815 = vadd.f32 %v746, %v748
      %816 = vadd.xlane.f32.xlu0 %v815
      %v817 = vpop.xlane.xlu0 %816
      %v818 = vadd.f32 %v752, %v754
      %819 = vadd.xlane.f32.xlu0 %v818
      %v820 = vpop.xlane.xlu0 %819
      %v821 = vadd.f32 %v756, %v758
      %822 = vadd.xlane.f32.xlu0 %v821
      %v823 = vpop.xlane.xlu0 %822
      %v824 = vadd.f32 %v762, %v764
      %825 = vadd.xlane.f32.xlu0 %v824
      %v826 = vpop.xlane.xlu0 %825
      %v827 = vadd.f32 %v766, %v768
      %828 = vadd.xlane.f32.xlu0 %v827
      %v829 = vpop.xlane.xlu0 %828
      %v830 = vadd.f32 %v772, %v774
      %831 = vadd.xlane.f32.xlu0 %v830
      %v832 = vpop.xlane.xlu0 %831
      %v833 = vadd.f32 %v776, %v778
      %834 = vadd.xlane.f32.xlu0 %v833
      %v835 = vpop.xlane.xlu0 %834
      %v836 = vadd.f32 %v782, %v784
      %837 = vadd.xlane.f32.xlu0 %v836
      %v838 = vpop.xlane.xlu0 %837
      %v839 = vadd.f32 %v786, %v788
      %840 = vadd.xlane.f32.xlu0 %v839
      %v841 = vpop.xlane.xlu0 %840
      %v842 = vadd.f32 %v792, %v794
      %843 = vadd.xlane.f32.xlu0 %v842
      %v844 = vpop.xlane.xlu0 %843
      %v845 = vadd.f32 %v796, %v798
      %846 = vadd.xlane.f32.xlu0 %v845
      %v847 = vpop.xlane.xlu0 %846
      %vm848 = vcmask 7168
      %849 = vst.msk [vmem:[%s235] sm:$0xff] %vm848, %v802
      %850 = vst.msk [vmem:[%s235 + $0x8] sm:$0xff] %vm848, %v805
      %851 = vst.msk [vmem:[%s235 + $0x10] sm:$0xff] %vm848, %v808
      %852 = vst.msk [vmem:[%s235 + $0x18] sm:$0xff] %vm848, %v811
      %853 = vst.msk [vmem:[%s235 + $0x20] sm:$0xff] %vm848, %v814
      %854 = vst.msk [vmem:[%s235 + $0x28] sm:$0xff] %vm848, %v817
      %855 = vst.msk [vmem:[%s235 + $0x30] sm:$0xff] %vm848, %v820
      %856 = vst.msk [vmem:[%s235 + $0x38] sm:$0xff] %vm848, %v823
      %857 = vst.msk [vmem:[%s235 + $0x40] sm:$0xff] %vm848, %v826
      %858 = vst.msk [vmem:[%s235 + $0x48] sm:$0xff] %vm848, %v829
      %859 = vst.msk [vmem:[%s235 + $0x50] sm:$0xff] %vm848, %v832
      %860 = vst.msk [vmem:[%s235 + $0x58] sm:$0xff] %vm848, %v835
      %861 = vst.msk [vmem:[%s235 + $0x60] sm:$0xff] %vm848, %v838
      %862 = vst.msk [vmem:[%s235 + $0x68] sm:$0xff] %vm848, %v841
      %863 = vst.msk [vmem:[%s235 + $0x70] sm:$0xff] %vm848, %v844
      %864 = vst.msk [vmem:[%s235 + $0x78] sm:$0xff] %vm848, %v847
      %v865 = vmul.f32 %v722, %v722
      %v866 = vmul.f32 %v724, %v724
      %v867 = vmul.f32 %v726, %v726
      %v868 = vmul.f32 %v728, %v728
      %v869 = vmul.f32 %v732, %v732
      %v870 = vmul.f32 %v734, %v734
      %v871 = vmul.f32 %v736, %v736
      %v872 = vmul.f32 %v738, %v738
      %v873 = vmul.f32 %v742, %v742
      %v874 = vmul.f32 %v744, %v744
      %v875 = vmul.f32 %v746, %v746
      %v876 = vmul.f32 %v748, %v748
      %v877 = vmul.f32 %v752, %v752
      %v878 = vmul.f32 %v754, %v754
      %v879 = vmul.f32 %v756, %v756
      %v880 = vmul.f32 %v758, %v758
      %v881 = vmul.f32 %v762, %v762
      %v882 = vmul.f32 %v764, %v764
      %v883 = vmul.f32 %v766, %v766
      %v884 = vmul.f32 %v768, %v768
      %v885 = vmul.f32 %v772, %v772
      %v886 = vmul.f32 %v774, %v774
      %v887 = vmul.f32 %v776, %v776
      %v888 = vmul.f32 %v778, %v778
      %v889 = vmul.f32 %v782, %v782
      %v890 = vmul.f32 %v784, %v784
      %v891 = vmul.f32 %v786, %v786
      %v892 = vmul.f32 %v788, %v788
      %v893 = vmul.f32 %v792, %v792
      %v894 = vmul.f32 %v794, %v794
      %v895 = vmul.f32 %v796, %v796
      %v896 = vmul.f32 %v798, %v798
      %v897 = vadd.f32 %v865, %v866
      %898 = vadd.xlane.f32.xlu0 %v897
      %v899 = vpop.xlane.xlu0 %898
      %v900 = vadd.f32 %v867, %v868
      %901 = vadd.xlane.f32.xlu0 %v900
      %v902 = vpop.xlane.xlu0 %901
      %v903 = vadd.f32 %v869, %v870
      %904 = vadd.xlane.f32.xlu0 %v903
      %v905 = vpop.xlane.xlu0 %904
      %v906 = vadd.f32 %v871, %v872
      %907 = vadd.xlane.f32.xlu0 %v906
      %v908 = vpop.xlane.xlu0 %907
      %v909 = vadd.f32 %v873, %v874
      %910 = vadd.xlane.f32.xlu0 %v909
      %v911 = vpop.xlane.xlu0 %910
      %v912 = vadd.f32 %v875, %v876
      %913 = vadd.xlane.f32.xlu0 %v912
      %v914 = vpop.xlane.xlu0 %913
      %v915 = vadd.f32 %v877, %v878
      %916 = vadd.xlane.f32.xlu0 %v915
      %v917 = vpop.xlane.xlu0 %916
      %v918 = vadd.f32 %v879, %v880
      %919 = vadd.xlane.f32.xlu0 %v918
      %v920 = vpop.xlane.xlu0 %919
      %v921 = vadd.f32 %v881, %v882
      %922 = vadd.xlane.f32.xlu0 %v921
      %v923 = vpop.xlane.xlu0 %922
      %v924 = vadd.f32 %v883, %v884
      %925 = vadd.xlane.f32.xlu0 %v924
      %v926 = vpop.xlane.xlu0 %925
      %v927 = vadd.f32 %v885, %v886
      %928 = vadd.xlane.f32.xlu0 %v927
      %v929 = vpop.xlane.xlu0 %928
      %v930 = vadd.f32 %v887, %v888
      %931 = vadd.xlane.f32.xlu0 %v930
      %v932 = vpop.xlane.xlu0 %931
      %v933 = vadd.f32 %v889, %v890
      %934 = vadd.xlane.f32.xlu0 %v933
      %v935 = vpop.xlane.xlu0 %934
      %v936 = vadd.f32 %v891, %v892
      %937 = vadd.xlane.f32.xlu0 %v936
      %v938 = vpop.xlane.xlu0 %937
      %v939 = vadd.f32 %v893, %v894
      %940 = vadd.xlane.f32.xlu0 %v939
      %v941 = vpop.xlane.xlu0 %940
      %v942 = vadd.f32 %v895, %v896
      %943 = vadd.xlane.f32.xlu0 %v942
      %v944 = vpop.xlane.xlu0 %943
      %vm945 = vcmask 15368
      %946 = vst.msk [vmem:[%s235] sm:$0xff] %vm945, %v899
      %947 = vst.msk [vmem:[%s235 + $0x8] sm:$0xff] %vm945, %v902
      %948 = vst.msk [vmem:[%s235 + $0x10] sm:$0xff] %vm945, %v905
      %949 = vst.msk [vmem:[%s235 + $0x18] sm:$0xff] %vm945, %v908
      %950 = vst.msk [vmem:[%s235 + $0x20] sm:$0xff] %vm945, %v911
      %951 = vst.msk [vmem:[%s235 + $0x28] sm:$0xff] %vm945, %v914
      %952 = vst.msk [vmem:[%s235 + $0x30] sm:$0xff] %vm945, %v917
      %953 = vst.msk [vmem:[%s235 + $0x38] sm:$0xff] %vm945, %v920
      %954 = vst.msk [vmem:[%s235 + $0x40] sm:$0xff] %vm945, %v923
      %955 = vst.msk [vmem:[%s235 + $0x48] sm:$0xff] %vm945, %v926
      %956 = vst.msk [vmem:[%s235 + $0x50] sm:$0xff] %vm945, %v929
      %957 = vst.msk [vmem:[%s235 + $0x58] sm:$0xff] %vm945, %v932
      %958 = vst.msk [vmem:[%s235 + $0x60] sm:$0xff] %vm945, %v935
      %959 = vst.msk [vmem:[%s235 + $0x68] sm:$0xff] %vm945, %v938
      %960 = vst.msk [vmem:[%s235 + $0x70] sm:$0xff] %vm945, %v941
      %961 = vst.msk [vmem:[%s235 + $0x78] sm:$0xff] %vm945, %v944
      %p962 = scmp.lt.s32.totalorder %s19, 1
      %s963 = scalar_select %p962, %s19, 1
      %p964 = scmp.lt.s32.totalorder %s20, 0
      %s965 = scalar_select %p964, %s20, 0
      %s966 = smul.addr %s965, 16
      %s967 = smul.addr %s963, 16
      %s968 = sadd.s32 %s966, %s967
      %s969 = smul.addr %s968, 8
      %s970 = scalar_lea.vmem %s4, %s969
      // Predicated region
      $region37: #{pixelgan_forward.2} parent=35 // pred_check
        %p971 = pneg %p138
      $region38: #{pixelgan_forward.2} parent=35 // pred_check_branch
        %973 = sbr.rel (%p971) target = $region40
      $region39: #{pixelgan_forward.2} parent=35 // pred_region
        _
      $region40: #{pixelgan_forward.2} parent=35 // pred_fallthru
        _
    $region36: #{pixelgan_forward.2} parent=5 // pred_fallthru
      _
    %p974 = scmp.le.s32.totalorder 2, %s10
    // Predicated region
    $region41: #{pixelgan_forward.2} parent=5 // pred_check
      %p975 = pneg %p974
    $region42: #{pixelgan_forward.2} parent=5 // pred_check_branch
      %977 = sbr.rel (%p975) target = $region44
    $region43: #{pixelgan_forward.2} parent=5 // pred_region
      %s978 = ssub.s32 %s10, 2
      // Predicated region
      $region45: #{pixelgan_forward.2} parent=43 // pred_check
        %p979 = pneg %p144
      $region46: #{pixelgan_forward.2} parent=43 // pred_check_branch
        %981 = sbr.rel (%p979) target = $region48
      $region47: #{pixelgan_forward.2} parent=43 // pred_region
        %p982 = scmp.lt.s32.totalorder %s21, 1
        %s983 = scalar_select %p982, %s21, 1
        %p984 = scmp.lt.s32.totalorder %s22, 0
        %s985 = scalar_select %p984, %s22, 0
        %s986 = smul.addr %s985, 16
        %s987 = smul.addr %s983, 16
        %s988 = sadd.s32 %s986, %s987
        %s989 = smul.addr %s988, 8
        %s990 = scalar_lea.vmem %s4, %s989
      $region48: #{pixelgan_forward.2} parent=43 // pred_fallthru
        _
    $region44: #{pixelgan_forward.2} parent=5 // pred_fallthru
      _
  $region6: #{pixelgan_forward.2} parent=0 // loop_footer
    %s14 = sadd.s32 1, %s10
  $region7: #{pixelgan_forward.2} parent=0 // loop_footer_branch
    %9 = sbr.rel target = $region3
  $region8: #{pixelgan_forward.2} parent=0 // loop_exit
    _

// kernel: pixelgan_forward.3
$region0: #{pixelgan_forward.3}
  #allocation0 [shape = 'u32[]', space=smem, size = 0x4, offset = 0x4, fixed_abs, tag = 'smem constant byte address 0x4 - core index']
  #allocation1 [shape = 'u32[144,128]{1,0:T(1,128)}', space=vmem, size = 0x12000, scoped, tag = 'internal scratch']
  #allocation2 [shape = 'f32[1,1]{1,0:T(1,128)S(1)}', space=vmem, size = 0x200, scoped, tag = 'scoped memory for pixelgan_forward.3']
  %s0 = inlined_call_operand.vmem [shape: bf16[2,3,256], index: 0, kind: input, shape index: {}]
  %s1 = inlined_call_operand.vmem [shape: f32[64,3], index: 1, kind: input, shape index: {}]
  %s2 = inlined_call_operand.vmem [shape: f32[64,1], index: 2, kind: input, shape index: {}]
  %s3 = inlined_call_operand.vmem [shape: bf16[128,64], index: 3, kind: input, shape index: {}]
  %s4 = inlined_call_operand.vmem [shape: f32[128,1], index: 4, kind: input, shape index: {}]
  %s5 = inlined_call_operand.vmem [shape: f32[128,1], index: 5, kind: input, shape index: {}]
  %s6 = inlined_call_operand.<no memory space> [shape: f32[1,1], index: 6, kind: input, shape index: {}]
  %s7 = inlined_call_operand.vmem [shape: f32[2,1,256], index: 7, kind: output, shape index: {0}]
  %s8 = inlined_call_operand.vmem [shape: f32[2,1,256], index: 8, kind: output, shape index: {1}]
  %9 = xla_tuple %s7, %s8
  %s10 = sld [smem:[#allocation0]]
  $region69: #{pixelgan_forward.3} parent=0
    _
  %s12 = ssub.s32 1, %s10
  %s13 = scalar_select 0, %s12, %s10
  %v14 = vstv %s6
  %15 = vst [vmem:[#allocation2] sm:$0x1] %v14
  loop: start=0, step=1, limit=4
  $region2: #{pixelgan_forward.3} parent=0 // loop_pre_header
    _
  $region3: #{pixelgan_forward.3} parent=0 // loop_header
    %s17 = sphi 0, %s21
    %p18 = scmp.ge.s32.totalorder %s17, 4
    %s24 = sphi 0, %s36
    %s25 = sphi 0, %s32
    %s26 = sphi 0, %s24
    %s27 = sphi 0, %s25
    %s28 = sphi 0, %s26
    %s29 = sphi 0, %s27
    %s41 = sphi 0, %s43
    %s44 = sphi 0, %s41
    %s45 = sphi 0, %s44
    %s61 = sphi 0, %s45
    %s65 = sphi 0, %s65
    %s67 = sphi 0, %s65
    %s68 = sphi 0, %s67
    %s82 = sphi 0, %s68
    %s86 = sphi 0, %s86
    %s88 = sphi 0, %s86
    %s89 = sphi 0, %s88
    %s103 = sphi 0, %s89
    %s107 = sphi 0, %s107
    %s109 = sphi 0, %s107
    %s110 = sphi 0, %s109
    %s124 = sphi 0, %s110
    %s128 = sphi 0, %s128
    %s130 = sphi 0, %s128
    %s131 = sphi 0, %s130
    %s145 = sphi 0, %s131
    %s149 = sphi 0, %s149
    %s151 = sphi 0, %s149
    %s152 = sphi 0, %s151
    %s166 = sphi 0, %s152
    %s170 = sphi 0, %s170
    %s172 = sphi 0, %s170
    %s173 = sphi 0, %s172
    %s187 = sphi 0, %s173
    %s195 = sphi 0, %s197
    %s198 = sphi 0, %s195
    %s199 = sphi 0, %s198
    %s215 = sphi 0, %s199
    %s223 = sphi 0, %s225
    %s226 = sphi 0, %s223
    %s227 = sphi 0, %s226
    %s243 = sphi 0, %s227
  $region4: #{pixelgan_forward.3} parent=0 // loop_header_branch
    %20 = sbr.rel (%p18) target = $region8
  $region5: #{pixelgan_forward.3} parent=0 // loop_body
    %s22 = ssub.s32 %s17, 1
    %s23 = ssub.s32 %s17, 2
    %s30 = sadd.s32 1, %s25
    %p31 = scmp.ge.s32.totalorder %s30, 1
    %s32 = scalar_select %p31, 0, %s30
    %s33 = sadd.s32 1, %s24
    %s34 = scalar_select %p31, %s33, %s24
    %p35 = scmp.ge.s32.totalorder %s34, 2
    %s36 = scalar_select %p35, 0, %s34
    %s37 = ssub.s32 %s24, %s36
    %s38 = ssub.s32 %s25, %s32
    %s39 = sor.u32 %s37, %s38
    %p40 = scmp.eq.s32.totalorder %s39, 0
    %s42 = sadd.s32 %s41, 1
    %s43 = scalar_select %p40, %s41, %s42
    %p46 = pneg %p40
    %p47 = scmp.eq.s32.totalorder %s17, 1
    %p48 = por %p46, %p47
    %p49 = scmp.ne.s32.totalorder %s41, %s44
    %p50 = scmp.eq.s32.totalorder %s17, 0
    %p51 = por %p49, %p50
    %p52 = scmp.ne.s32.totalorder %s41, %s44
    %p53 = scmp.eq.s32.totalorder %s22, 1
    %p54 = por %p52, %p53
    %p55 = scmp.ne.s32.totalorder %s44, %s45
    %p56 = scmp.eq.s32.totalorder %s22, 0
    %p57 = por %p55, %p56
    %p58 = scmp.ne.s32.totalorder %s44, %s45
    %p59 = scmp.eq.s32.totalorder %s23, 1
    %p60 = por %p58, %p59
    %p62 = scmp.ne.s32.totalorder %s45, %s61
    %p63 = scmp.eq.s32.totalorder %s23, 0
    %p64 = por %p62, %p63
    %s66 = sadd.s32 %s65, 1
    %p69 = scmp.eq.s32.totalorder %s17, 1
    %p70 = scmp.ne.s32.totalorder %s65, %s67
    %p71 = scmp.eq.s32.totalorder %s17, 0
    %p72 = por %p70, %p71
    %p73 = scmp.ne.s32.totalorder %s65, %s67
    %p74 = scmp.eq.s32.totalorder %s22, 1
    %p75 = por %p73, %p74
    %p76 = scmp.ne.s32.totalorder %s67, %s68
    %p77 = scmp.eq.s32.totalorder %s22, 0
    %p78 = por %p76, %p77
    %p79 = scmp.ne.s32.totalorder %s67, %s68
    %p80 = scmp.eq.s32.totalorder %s23, 1
    %p81 = por %p79, %p80
    %p83 = scmp.ne.s32.totalorder %s68, %s82
    %p84 = scmp.eq.s32.totalorder %s23, 0
    %p85 = por %p83, %p84
    %s87 = sadd.s32 %s86, 1
    %p90 = scmp.eq.s32.totalorder %s17, 1
    %p91 = scmp.ne.s32.totalorder %s86, %s88
    %p92 = scmp.eq.s32.totalorder %s17, 0
    %p93 = por %p91, %p92
    %p94 = scmp.ne.s32.totalorder %s86, %s88
    %p95 = scmp.eq.s32.totalorder %s22, 1
    %p96 = por %p94, %p95
    %p97 = scmp.ne.s32.totalorder %s88, %s89
    %p98 = scmp.eq.s32.totalorder %s22, 0
    %p99 = por %p97, %p98
    %p100 = scmp.ne.s32.totalorder %s88, %s89
    %p101 = scmp.eq.s32.totalorder %s23, 1
    %p102 = por %p100, %p101
    %p104 = scmp.ne.s32.totalorder %s89, %s103
    %p105 = scmp.eq.s32.totalorder %s23, 0
    %p106 = por %p104, %p105
    %s108 = sadd.s32 %s107, 1
    %p111 = scmp.eq.s32.totalorder %s17, 1
    %p112 = scmp.ne.s32.totalorder %s107, %s109
    %p113 = scmp.eq.s32.totalorder %s17, 0
    %p114 = por %p112, %p113
    %p115 = scmp.ne.s32.totalorder %s107, %s109
    %p116 = scmp.eq.s32.totalorder %s22, 1
    %p117 = por %p115, %p116
    %p118 = scmp.ne.s32.totalorder %s109, %s110
    %p119 = scmp.eq.s32.totalorder %s22, 0
    %p120 = por %p118, %p119
    %p121 = scmp.ne.s32.totalorder %s109, %s110
    %p122 = scmp.eq.s32.totalorder %s23, 1
    %p123 = por %p121, %p122
    %p125 = scmp.ne.s32.totalorder %s110, %s124
    %p126 = scmp.eq.s32.totalorder %s23, 0
    %p127 = por %p125, %p126
    %s129 = sadd.s32 %s128, 1
    %p132 = scmp.eq.s32.totalorder %s17, 1
    %p133 = scmp.ne.s32.totalorder %s128, %s130
    %p134 = scmp.eq.s32.totalorder %s17, 0
    %p135 = por %p133, %p134
    %p136 = scmp.ne.s32.totalorder %s128, %s130
    %p137 = scmp.eq.s32.totalorder %s22, 1
    %p138 = por %p136, %p137
    %p139 = scmp.ne.s32.totalorder %s130, %s131
    %p140 = scmp.eq.s32.totalorder %s22, 0
    %p141 = por %p139, %p140
    %p142 = scmp.ne.s32.totalorder %s130, %s131
    %p143 = scmp.eq.s32.totalorder %s23, 1
    %p144 = por %p142, %p143
    %p146 = scmp.ne.s32.totalorder %s131, %s145
    %p147 = scmp.eq.s32.totalorder %s23, 0
    %p148 = por %p146, %p147
    %s150 = sadd.s32 %s149, 1
    %p153 = scmp.eq.s32.totalorder %s17, 1
    %p154 = scmp.ne.s32.totalorder %s149, %s151
    %p155 = scmp.eq.s32.totalorder %s17, 0
    %p156 = por %p154, %p155
    %p157 = scmp.ne.s32.totalorder %s149, %s151
    %p158 = scmp.eq.s32.totalorder %s22, 1
    %p159 = por %p157, %p158
    %p160 = scmp.ne.s32.totalorder %s151, %s152
    %p161 = scmp.eq.s32.totalorder %s22, 0
    %p162 = por %p160, %p161
    %p163 = scmp.ne.s32.totalorder %s151, %s152
    %p164 = scmp.eq.s32.totalorder %s23, 1
    %p165 = por %p163, %p164
    %p167 = scmp.ne.s32.totalorder %s152, %s166
    %p168 = scmp.eq.s32.totalorder %s23, 0
    %p169 = por %p167, %p168
    %s171 = sadd.s32 %s170, 1
    %p174 = scmp.eq.s32.totalorder %s17, 1
    %p175 = scmp.ne.s32.totalorder %s170, %s172
    %p176 = scmp.eq.s32.totalorder %s17, 0
    %p177 = por %p175, %p176
    %p178 = scmp.ne.s32.totalorder %s170, %s172
    %p179 = scmp.eq.s32.totalorder %s22, 1
    %p180 = por %p178, %p179
    %p181 = scmp.ne.s32.totalorder %s172, %s173
    %p182 = scmp.eq.s32.totalorder %s22, 0
    %p183 = por %p181, %p182
    %p184 = scmp.ne.s32.totalorder %s172, %s173
    %p185 = scmp.eq.s32.totalorder %s23, 1
    %p186 = por %p184, %p185
    %p188 = scmp.ne.s32.totalorder %s173, %s187
    %p189 = scmp.eq.s32.totalorder %s23, 0
    %p190 = por %p188, %p189
    %s191 = ssub.s32 %s24, %s36
    %s192 = ssub.s32 %s25, %s32
    %s193 = sor.u32 %s191, %s192
    %p194 = scmp.eq.s32.totalorder %s193, 0
    %s196 = sadd.s32 %s195, 1
    %s197 = scalar_select %p194, %s195, %s196
    %p200 = pneg %p194
    %p201 = scmp.eq.s32.totalorder %s17, 1
    %p202 = por %p200, %p201
    %p203 = scmp.ne.s32.totalorder %s195, %s198
    %p204 = scmp.eq.s32.totalorder %s17, 0
    %p205 = por %p203, %p204
    %p206 = scmp.ne.s32.totalorder %s195, %s198
    %p207 = scmp.eq.s32.totalorder %s22, 1
    %p208 = por %p206, %p207
    %p209 = scmp.ne.s32.totalorder %s198, %s199
    %p210 = scmp.eq.s32.totalorder %s22, 0
    %p211 = por %p209, %p210
    %p212 = scmp.ne.s32.totalorder %s198, %s199
    %p213 = scmp.eq.s32.totalorder %s23, 1
    %p214 = por %p212, %p213
    %p216 = scmp.ne.s32.totalorder %s199, %s215
    %p217 = scmp.eq.s32.totalorder %s23, 0
    %p218 = por %p216, %p217
    %s219 = ssub.s32 %s24, %s36
    %s220 = ssub.s32 %s25, %s32
    %s221 = sor.u32 %s219, %s220
    %p222 = scmp.eq.s32.totalorder %s221, 0
    %s224 = sadd.s32 %s223, 1
    %s225 = scalar_select %p222, %s223, %s224
    %p228 = pneg %p222
    %p229 = scmp.eq.s32.totalorder %s17, 1
    %p230 = por %p228, %p229
    %p231 = scmp.ne.s32.totalorder %s223, %s226
    %p232 = scmp.eq.s32.totalorder %s17, 0
    %p233 = por %p231, %p232
    %p234 = scmp.ne.s32.totalorder %s223, %s226
    %p235 = scmp.eq.s32.totalorder %s22, 1
    %p236 = por %p234, %p235
    %p237 = scmp.ne.s32.totalorder %s226, %s227
    %p238 = scmp.eq.s32.totalorder %s22, 0
    %p239 = por %p237, %p238
    %p240 = scmp.ne.s32.totalorder %s226, %s227
    %p241 = scmp.eq.s32.totalorder %s23, 1
    %p242 = por %p240, %p241
    %p244 = scmp.ne.s32.totalorder %s227, %s243
    %p245 = scmp.eq.s32.totalorder %s23, 0
    %p246 = por %p244, %p245
    %p247 = scmp.le.s32.totalorder 1, %s17
    %p248 = scmp.lt.s32.totalorder %s17, 3
    %p249 = pnand %p247, %p248
    %p250 = pneg %p249
    // Predicated region
    $region9: #{pixelgan_forward.3} parent=5 // pred_check
      _
    $region10: #{pixelgan_forward.3} parent=5 // pred_check_branch
      %252 = sbr.rel (%p249) target = $region12
    $region11: #{pixelgan_forward.3} parent=5 // pred_region
      %s253 = ssub.s32 %s17, 1
      // Predicated region
      $region13: #{pixelgan_forward.3} parent=11 // pred_check
        %p254 = pneg %p78
      $region14: #{pixelgan_forward.3} parent=11 // pred_check_branch
        %256 = sbr.rel (%p254) target = $region16
      $region15: #{pixelgan_forward.3} parent=11 // pred_region
        _
      $region16: #{pixelgan_forward.3} parent=11 // pred_fallthru
        _
      // Predicated region
      $region17: #{pixelgan_forward.3} parent=11 // pred_check
        %p257 = pneg %p99
      $region18: #{pixelgan_forward.3} parent=11 // pred_check_branch
        %259 = sbr.rel (%p257) target = $region20
      $region19: #{pixelgan_forward.3} parent=11 // pred_region
        _
      $region20: #{pixelgan_forward.3} parent=11 // pred_fallthru
        _
      // Predicated region
      $region21: #{pixelgan_forward.3} parent=11 // pred_check
        %p260 = pneg %p120
      $region22: #{pixelgan_forward.3} parent=11 // pred_check_branch
        %262 = sbr.rel (%p260) target = $region24
      $region23: #{pixelgan_forward.3} parent=11 // pred_region
        _
      $region24: #{pixelgan_forward.3} parent=11 // pred_fallthru
        _
      // Predicated region
      $region25: #{pixelgan_forward.3} parent=11 // pred_check
        %p263 = pneg %p141
      $region26: #{pixelgan_forward.3} parent=11 // pred_check_branch
        %265 = sbr.rel (%p263) target = $region28
      $region27: #{pixelgan_forward.3} parent=11 // pred_region
        _
      $region28: #{pixelgan_forward.3} parent=11 // pred_fallthru
        _
      // Predicated region
      $region29: #{pixelgan_forward.3} parent=11 // pred_check
        %p266 = pneg %p162
      $region30: #{pixelgan_forward.3} parent=11 // pred_check_branch
        %268 = sbr.rel (%p266) target = $region32
      $region31: #{pixelgan_forward.3} parent=11 // pred_region
        _
      $region32: #{pixelgan_forward.3} parent=11 // pred_fallthru
        _
      // Predicated region
      $region33: #{pixelgan_forward.3} parent=11 // pred_check
        %p269 = pneg %p183
      $region34: #{pixelgan_forward.3} parent=11 // pred_check_branch
        %271 = sbr.rel (%p269) target = $region36
      $region35: #{pixelgan_forward.3} parent=11 // pred_region
        _
      $region36: #{pixelgan_forward.3} parent=11 // pred_fallthru
        _
    $region12: #{pixelgan_forward.3} parent=5 // pred_fallthru
      _
    %p272 = scmp.lt.s32.totalorder %s17, 2
    // Predicated region
    $region37: #{pixelgan_forward.3} parent=5 // pred_check
      %p273 = pneg %p272
    $region38: #{pixelgan_forward.3} parent=5 // pred_check_branch
      %275 = sbr.rel (%p273) target = $region40
    $region39: #{pixelgan_forward.3} parent=5 // pred_region
      // Predicated region
      $region41: #{pixelgan_forward.3} parent=39 // pred_check
        %p276 = pneg %p51
      $region42: #{pixelgan_forward.3} parent=39 // pred_check_branch
        %278 = sbr.rel (%p276) target = $region44
      $region43: #{pixelgan_forward.3} parent=39 // pred_region
        %s279 = smul.u32 2, %s25
        %p280 = scmp.lt.s32.totalorder %s24, 1
        %s281 = scalar_select %p280, %s24, 1
        %p282 = scmp.lt.s32.totalorder %s279, 1
        %s283 = scalar_select %p282, %s279, 1
        %s284 = smul.addr %s281, 2
        %s285 = sadd.s32 %s283, %s284
        %s286 = smul.addr %s285, 2
        %s287 = scalar_lea.vmem %s0, %s286
        %s288 = smul.u32 2, %s25
      $region44: #{pixelgan_forward.3} parent=39 // pred_fallthru
        _
    $region40: #{pixelgan_forward.3} parent=5 // pred_fallthru
      _
    %p289 = scmp.le.s32.totalorder 1, %s17
    %p290 = scmp.lt.s32.totalorder %s17, 3
    %p291 = pnand %p289, %p290
    %p292 = pneg %p291
    // Predicated region
    $region45: #{pixelgan_forward.3} parent=5 // pred_check
      _
    $region46: #{pixelgan_forward.3} parent=5 // pred_check_branch
      %294 = sbr.rel (%p291) target = $region48
    $region47: #{pixelgan_forward.3} parent=5 // pred_region
      %s295 = ssub.s32 %s17, 1
      %s296 = smul.u32 2, %s27
      %p297 = scmp.lt.s32.totalorder %s26, 1
      %s298 = scalar_select %p297, %s26, 1
      %p299 = scmp.lt.s32.totalorder %s296, 1
      %s300 = scalar_select %p299, %s296, 1
      %s301 = smul.addr %s298, 2
      %s302 = sadd.s32 %s300, %s301
      %s303 = smul.addr %s302, 2
      %s304 = scalar_lea.vmem %s0, %s303
      %p305 = pneg %p57
      %p306 = pneg %p54
      %p307 = pneg %p78
      %p308 = pneg %p75
      %p309 = pneg %p99
      %p310 = pneg %p96
      %p311 = pneg %p120
      %p312 = pneg %p117
      %p313 = pneg %p141
      %p314 = pneg %p138
      %p315 = pneg %p162
      %p316 = pneg %p159
      %p317 = pneg %p183
      %p318 = pneg %p180
      %p319 = pneg %p211
      %p320 = pneg %p208
      %s321 = smul.u32 2, %s27
      %p322 = scmp.lt.s32.totalorder %s26, 1
      %s323 = scalar_select %p322, %s26, 1
      %p324 = scmp.lt.s32.totalorder %s321, 1
      %s325 = scalar_select %p324, %s321, 1
      %s326 = smul.addr %s323, 2
      %s327 = sadd.s32 %s325, %s326
      %s328 = scalar_lea.vmem %s7, %s327
      %p329 = pneg %p239
      %p330 = pneg %p236
      %s331 = smul.u32 2, %s27
      %p332 = scmp.lt.s32.totalorder %s26, 1
      %s333 = scalar_select %p332, %s26, 1
      %p334 = scmp.lt.s32.totalorder %s331, 1
      %s335 = scalar_select %p334, %s331, 1
      %s336 = smul.addr %s333, 2
      %s337 = sadd.s32 %s335, %s336
      %s338 = scalar_lea.vmem %s8, %s337
      %s339 = smul.u32 2, %s27
      %p340 = scmp.lt.s32.totalorder %s26, 1
      %s341 = scalar_select %p340, %s26, 1
      %p342 = scmp.lt.s32.totalorder %s339, 1
      %s343 = scalar_select %p342, %s339, 1
      %s344 = smul.addr %s341, 2
      %s345 = sadd.s32 %s343, %s344
      %s346 = smul.addr %s345, 2
      %s347 = scalar_lea.vmem %s0, %s346
      %s348 = smul.u32 2, %s27
      %s349 = smul.u32 2, %s27
      %p350 = scmp.lt.s32.totalorder %s26, 1
      %s351 = scalar_select %p350, %s26, 1
      %p352 = scmp.lt.s32.totalorder %s349, 1
      %s353 = scalar_select %p352, %s349, 1
      %s354 = smul.addr %s351, 2
      %s355 = sadd.s32 %s353, %s354
      %s356 = scalar_lea.vmem %s7, %s355
      %s357 = smul.u32 2, %s27
      %s358 = smul.u32 2, %s27
      %p359 = scmp.lt.s32.totalorder %s26, 1
      %s360 = scalar_select %p359, %s26, 1
      %p361 = scmp.lt.s32.totalorder %s358, 1
      %s362 = scalar_select %p361, %s358, 1
      %s363 = smul.addr %s360, 2
      %s364 = sadd.s32 %s362, %s363
      %s365 = scalar_lea.vmem %s8, %s364
      %s366 = smul.u32 2, %s27
      %v368 = vld [vmem:[%s347] sm:$0xf]
      %v369 = vunpack.c.l.bf16 %v368
      %v370 = vld [vmem:[%s1] sm:$0xff]
      %v371 = vld [vmem:[%s1 + $0x8] sm:$0xff]
      %v372 = vld [vmem:[%s1 + $0x10] sm:$0xff]
      %v373 = vld [vmem:[%s1 + $0x18] sm:$0xff]
      %v374 = vld [vmem:[%s1 + $0x20] sm:$0xff]
      %v375 = vld [vmem:[%s1 + $0x28] sm:$0xff]
      %v376 = vld [vmem:[%s1 + $0x30] sm:$0xff]
      %v377 = vld [vmem:[%s1 + $0x38] sm:$0xff]
      %379 = vset.pattern.permute.xlu0 0
      %380 = vperm.xlu0 %379, %v370
      %v381 = vpop.permute.xlu0 %380
      %384 = vset.pattern.permute.xlu0 0
      %385 = vperm.xlu0 %384, %v371
      %v386 = vpop.permute.xlu0 %385
      %389 = vset.pattern.permute.xlu0 0
      %390 = vperm.xlu0 %389, %v372
      %v391 = vpop.permute.xlu0 %390
      %394 = vset.pattern.permute.xlu0 0
      %395 = vperm.xlu0 %394, %v373
      %v396 = vpop.permute.xlu0 %395
      %399 = vset.pattern.permute.xlu0 0
      %400 = vperm.xlu0 %399, %v374
      %v401 = vpop.permute.xlu0 %400
      %404 = vset.pattern.permute.xlu0 0
      %405 = vperm.xlu0 %404, %v375
      %v406 = vpop.permute.xlu0 %405
      %409 = vset.pattern.permute.xlu0 0
      %410 = vperm.xlu0 %409, %v376
      %v411 = vpop.permute.xlu0 %410
      %414 = vset.pattern.permute.xlu0 0
      %415 = vperm.xlu0 %414, %v377
      %v416 = vpop.permute.xlu0 %415
      %v419 = vlaneseq
      %v420 = vshrl.u32 %v419, 7
      %v421 = vsub.s32 0, %v420
      %v422 = vrot.slane %v369, %v421
      %v423 = vlaneseq
      %v424 = vshrl.u32 %v423, 7
      %v425 = vsub.s32 4, %v424
      %v426 = vrot.slane %v369, %v425
      %v429 = vlaneseq
      %v430 = vshrl.u32 %v429, 7
      %v431 = vsub.s32 0, %v430
      %v432 = vrot.slane %v422, %v431
      %v433 = vlaneseq
      %v434 = vshrl.u32 %v433, 7
      %v435 = vsub.s32 0, %v434
      %v436 = vrot.slane %v426, %v435
      %v437 = vmul.f32 %v381, %v432
      %v438 = vmul.f32 %v381, %v436
      %v439 = vmul.f32 %v386, %v432
      %v440 = vmul.f32 %v386, %v436
      %v441 = vmul.f32 %v391, %v432
      %v442 = vmul.f32 %v391, %v436
      %v443 = vmul.f32 %v396, %v432
      %v444 = vmul.f32 %v396, %v436
      %v445 = vmul.f32 %v401, %v432
      %v446 = vmul.f32 %v401, %v436
      %v447 = vmul.f32 %v406, %v432
      %v448 = vmul.f32 %v406, %v436
      %v449 = vmul.f32 %v411, %v432
      %v450 = vmul.f32 %v411, %v436
      %v451 = vmul.f32 %v416, %v432
      %v452 = vmul.f32 %v416, %v436
      %v453 = vld [vmem:[%s2] sm:$0xff]
      %v454 = vld [vmem:[%s2 + $0x8] sm:$0xff]
      %v455 = vld [vmem:[%s2 + $0x10] sm:$0xff]
      %v456 = vld [vmem:[%s2 + $0x18] sm:$0xff]
      %v457 = vld [vmem:[%s2 + $0x20] sm:$0xff]
      %v458 = vld [vmem:[%s2 + $0x28] sm:$0xff]
      %v459 = vld [vmem:[%s2 + $0x30] sm:$0xff]
      %v460 = vld [vmem:[%s2 + $0x38] sm:$0xff]
      %462 = vset.pattern.permute.xlu0 0
      %463 = vperm.xlu0 %462, %v453
      %v464 = vpop.permute.xlu0 %463
      %467 = vset.pattern.permute.xlu0 0
      %468 = vperm.xlu0 %467, %v454
      %v469 = vpop.permute.xlu0 %468
      %472 = vset.pattern.permute.xlu0 0
      %473 = vperm.xlu0 %472, %v455
      %v474 = vpop.permute.xlu0 %473
      %477 = vset.pattern.permute.xlu0 0
      %478 = vperm.xlu0 %477, %v456
      %v479 = vpop.permute.xlu0 %478
      %482 = vset.pattern.permute.xlu0 0
      %483 = vperm.xlu0 %482, %v457
      %v484 = vpop.permute.xlu0 %483
      %487 = vset.pattern.permute.xlu0 0
      %488 = vperm.xlu0 %487, %v458
      %v489 = vpop.permute.xlu0 %488
      %492 = vset.pattern.permute.xlu0 0
      %493 = vperm.xlu0 %492, %v459
      %v494 = vpop.permute.xlu0 %493
      %497 = vset.pattern.permute.xlu0 0
      %498 = vperm.xlu0 %497, %v460
      %v499 = vpop.permute.xlu0 %498
      %v501 = vadd.f32 %v437, %v464
      %v502 = vadd.f32 %v438, %v464
      %v503 = vadd.f32 %v439, %v469
      %v504 = vadd.f32 %v440, %v469
      %v505 = vadd.f32 %v441, %v474
      %v506 = vadd.f32 %v442, %v474
      %v507 = vadd.f32 %v443, %v479
      %v508 = vadd.f32 %v444, %v479
      %v509 = vadd.f32 %v445, %v484
      %v510 = vadd.f32 %v446, %v484
      %v511 = vadd.f32 %v447, %v489
      %v512 = vadd.f32 %v448, %v489
      %v513 = vadd.f32 %v449, %v494
      %v514 = vadd.f32 %v450, %v494
      %v515 = vadd.f32 %v451, %v499
      %v516 = vadd.f32 %v452, %v499
      %517 = vset.pattern.permute.xlu0 1
      %518 = vperm.xlu0 %517, %v370
      %v519 = vpop.permute.xlu0 %518
      %521 = vset.pattern.permute.xlu0 1
      %522 = vperm.xlu0 %521, %v371
      %v523 = vpop.permute.xlu0 %522
      %525 = vset.pattern.permute.xlu0 1
      %526 = vperm.xlu0 %525, %v372
      %v527 = vpop.permute.xlu0 %526
      %529 = vset.pattern.permute.xlu0 1
      %530 = vperm.xlu0 %529, %v373
      %v531 = vpop.permute.xlu0 %530
      %533 = vset.pattern.permute.xlu0 1
      %534 = vperm.xlu0 %533, %v374
      %v535 = vpop.permute.xlu0 %534
      %537 = vset.pattern.permute.xlu0 1
      %538 = vperm.xlu0 %537, %v375
      %v539 = vpop.permute.xlu0 %538
      %541 = vset.pattern.permute.xlu0 1
      %542 = vperm.xlu0 %541, %v376
      %v543 = vpop.permute.xlu0 %542
      %545 = vset.pattern.permute.xlu0 1
      %546 = vperm.xlu0 %545, %v377
      %v547 = vpop.permute.xlu0 %546
      %v549 = vlaneseq
      %v550 = vshrl.u32 %v549, 7
      %v551 = vsub.s32 1, %v550
      %v552 = vrot.slane %v369, %v551
      %v553 = vlaneseq
      %v554 = vshrl.u32 %v553, 7
      %v555 = vsub.s32 5, %v554
      %v556 = vrot.slane %v369, %v555
      %v559 = vlaneseq
      %v560 = vshrl.u32 %v559, 7
      %v561 = vsub.s32 1, %v560
      %v562 = vrot.slane %v552, %v561
      %v563 = vlaneseq
      %v564 = vshrl.u32 %v563, 7
      %v565 = vsub.s32 1, %v564
      %v566 = vrot.slane %v556, %v565
      %v567 = vmul.f32 %v519, %v562
      %v568 = vmul.f32 %v519, %v566
      %v569 = vmul.f32 %v523, %v562
      %v570 = vmul.f32 %v523, %v566
      %v571 = vmul.f32 %v527, %v562
      %v572 = vmul.f32 %v527, %v566
      %v573 = vmul.f32 %v531, %v562
      %v574 = vmul.f32 %v531, %v566
      %v575 = vmul.f32 %v535, %v562
      %v576 = vmul.f32 %v535, %v566
      %v577 = vmul.f32 %v539, %v562
      %v578 = vmul.f32 %v539, %v566
      %v579 = vmul.f32 %v543, %v562
      %v580 = vmul.f32 %v543, %v566
      %v581 = vmul.f32 %v547, %v562
      %v582 = vmul.f32 %v547, %v566
      %v583 = vadd.f32 %v501, %v567
      %v584 = vadd.f32 %v502, %v568
      %v585 = vadd.f32 %v503, %v569
      %v586 = vadd.f32 %v504, %v570
      %v587 = vadd.f32 %v505, %v571
      %v588 = vadd.f32 %v506, %v572
      %v589 = vadd.f32 %v507, %v573
      %v590 = vadd.f32 %v508, %v574
      %v591 = vadd.f32 %v509, %v575
      %v592 = vadd.f32 %v510, %v576
      %v593 = vadd.f32 %v511, %v577
      %v594 = vadd.f32 %v512, %v578
      %v595 = vadd.f32 %v513, %v579
      %v596 = vadd.f32 %v514, %v580
      %v597 = vadd.f32 %v515, %v581
      %v598 = vadd.f32 %v516, %v582
      %599 = vset.pattern.permute.xlu0 2
      %600 = vperm.xlu0 %599, %v370
      %v601 = vpop.permute.xlu0 %600
      %603 = vset.pattern.permute.xlu0 2
      %604 = vperm.xlu0 %603, %v371
      %v605 = vpop.permute.xlu0 %604
      %607 = vset.pattern.permute.xlu0 2
      %608 = vperm.xlu0 %607, %v372
      %v609 = vpop.permute.xlu0 %608
      %611 = vset.pattern.permute.xlu0 2
      %612 = vperm.xlu0 %611, %v373
      %v613 = vpop.permute.xlu0 %612
      %615 = vset.pattern.permute.xlu0 2
      %616 = vperm.xlu0 %615, %v374
      %v617 = vpop.permute.xlu0 %616
      %619 = vset.pattern.permute.xlu0 2
      %620 = vperm.xlu0 %619, %v375
      %v621 = vpop.permute.xlu0 %620
      %623 = vset.pattern.permute.xlu0 2
      %624 = vperm.xlu0 %623, %v376
      %v625 = vpop.permute.xlu0 %624
      %627 = vset.pattern.permute.xlu0 2
      %628 = vperm.xlu0 %627, %v377
      %v629 = vpop.permute.xlu0 %628
      %v631 = vlaneseq
      %v632 = vshrl.u32 %v631, 7
      %v633 = vsub.s32 2, %v632
      %v634 = vrot.slane %v369, %v633
      %v635 = vlaneseq
      %v636 = vshrl.u32 %v635, 7
      %v637 = vsub.s32 6, %v636
      %v638 = vrot.slane %v369, %v637
      %v641 = vlaneseq
      %v642 = vshrl.u32 %v641, 7
      %v643 = vsub.s32 2, %v642
      %v644 = vrot.slane %v634, %v643
      %v645 = vlaneseq
      %v646 = vshrl.u32 %v645, 7
      %v647 = vsub.s32 2, %v646
      %v648 = vrot.slane %v638, %v647
      %v649 = vmul.f32 %v601, %v644
      %v650 = vmul.f32 %v601, %v648
      %v651 = vmul.f32 %v605, %v644
      %v652 = vmul.f32 %v605, %v648
      %v653 = vmul.f32 %v609, %v644
      %v654 = vmul.f32 %v609, %v648
      %v655 = vmul.f32 %v613, %v644
      %v656 = vmul.f32 %v613, %v648
      %v657 = vmul.f32 %v617, %v644
      %v658 = vmul.f32 %v617, %v648
      %v659 = vmul.f32 %v621, %v644
      %v660 = vmul.f32 %v621, %v648
      %v661 = vmul.f32 %v625, %v644
      %v662 = vmul.f32 %v625, %v648
      %v663 = vmul.f32 %v629, %v644
      %v664 = vmul.f32 %v629, %v648
      %v665 = vadd.f32 %v583, %v649
      %v666 = vadd.f32 %v584, %v650
      %v667 = vadd.f32 %v585, %v651
      %v668 = vadd.f32 %v586, %v652
      %v669 = vadd.f32 %v587, %v653
      %v670 = vadd.f32 %v588, %v654
      %v671 = vadd.f32 %v589, %v655
      %v672 = vadd.f32 %v590, %v656
      %v673 = vadd.f32 %v591, %v657
      %v674 = vadd.f32 %v592, %v658
      %v675 = vadd.f32 %v593, %v659
      %v676 = vadd.f32 %v594, %v660
      %v677 = vadd.f32 %v595, %v661
      %v678 = vadd.f32 %v596, %v662
      %v679 = vadd.f32 %v597, %v663
      %v680 = vadd.f32 %v598, %v664
      %vm681 = vcmp.gt.f32.partialorder %v665, 0.0
      %vm682 = vcmp.gt.f32.partialorder %v666, 0.0
      %vm683 = vcmp.gt.f32.partialorder %v667, 0.0
      %vm684 = vcmp.gt.f32.partialorder %v668, 0.0
      %vm685 = vcmp.gt.f32.partialorder %v669, 0.0
      %vm686 = vcmp.gt.f32.partialorder %v670, 0.0
      %vm687 = vcmp.gt.f32.partialorder %v671, 0.0
      %vm688 = vcmp.gt.f32.partialorder %v672, 0.0
      %vm689 = vcmp.gt.f32.partialorder %v673, 0.0
      %vm690 = vcmp.gt.f32.partialorder %v674, 0.0
      %vm691 = vcmp.gt.f32.partialorder %v675, 0.0
      %vm692 = vcmp.gt.f32.partialorder %v676, 0.0
      %vm693 = vcmp.gt.f32.partialorder %v677, 0.0
      %vm694 = vcmp.gt.f32.partialorder %v678, 0.0
      %vm695 = vcmp.gt.f32.partialorder %v679, 0.0
      %vm696 = vcmp.gt.f32.partialorder %v680, 0.0
      %v697 = vmul.f32 %v665, 0.2
      %v698 = vmul.f32 %v666, 0.2
      %v699 = vmul.f32 %v667, 0.2
      %v700 = vmul.f32 %v668, 0.2
      %v701 = vmul.f32 %v669, 0.2
      %v702 = vmul.f32 %v670, 0.2
      %v703 = vmul.f32 %v671, 0.2
      %v704 = vmul.f32 %v672, 0.2
      %v705 = vmul.f32 %v673, 0.2
      %v706 = vmul.f32 %v674, 0.2
      %v707 = vmul.f32 %v675, 0.2
      %v708 = vmul.f32 %v676, 0.2
      %v709 = vmul.f32 %v677, 0.2
      %v710 = vmul.f32 %v678, 0.2
      %v711 = vmul.f32 %v679, 0.2
      %v712 = vmul.f32 %v680, 0.2
      %v713 = vsel %vm681, %v665, %v697
      %v714 = vsel %vm682, %v666, %v698
      %v715 = vsel %vm683, %v667, %v699
      %v716 = vsel %vm684, %v668, %v700
      %v717 = vsel %vm685, %v669, %v701
      %v718 = vsel %vm686, %v670, %v702
      %v719 = vsel %vm687, %v671, %v703
      %v720 = vsel %vm688, %v672, %v704
      %v721 = vsel %vm689, %v673, %v705
      %v722 = vsel %vm690, %v674, %v706
      %v723 = vsel %vm691, %v675, %v707
      %v724 = vsel %vm692, %v676, %v708
      %v725 = vsel %vm693, %v677, %v709
      %v726 = vsel %vm694, %v678, %v710
      %v727 = vsel %vm695, %v679, %v711
      %v728 = vsel %vm696, %v680, %v712
      %v729 = vld [vmem:[%s3] sm:$0xf]
      %v730 = vld [vmem:[%s3 + $0x4] sm:$0xf]
      %v731 = vld [vmem:[%s3 + $0x8] sm:$0xf]
      %v732 = vld [vmem:[%s3 + $0xc] sm:$0xf]
      %v733 = vld [vmem:[%s3 + $0x10] sm:$0xf]
      %v734 = vld [vmem:[%s3 + $0x14] sm:$0xf]
      %v735 = vld [vmem:[%s3 + $0x18] sm:$0xf]
      %v736 = vld [vmem:[%s3 + $0x1c] sm:$0xf]
      %v737 = vld [vmem:[%s3 + $0x20] sm:$0xf]
      %v738 = vld [vmem:[%s3 + $0x24] sm:$0xf]
      %v739 = vld [vmem:[%s3 + $0x28] sm:$0xf]
      %v740 = vld [vmem:[%s3 + $0x2c] sm:$0xf]
      %v741 = vld [vmem:[%s3 + $0x30] sm:$0xf]
      %v742 = vld [vmem:[%s3 + $0x34] sm:$0xf]
      %v743 = vld [vmem:[%s3 + $0x38] sm:$0xf]
      %v744 = vld [vmem:[%s3 + $0x3c] sm:$0xf]
      %v745 = vpack.c.bf16 %v715, %v713
      %v746 = vpack.c.bf16 %v716, %v714
      %v747 = vpack.c.bf16 %v719, %v717
      %v748 = vpack.c.bf16 %v720, %v718
      %v749 = vpack.c.bf16 %v723, %v721
      %v750 = vpack.c.bf16 %v724, %v722
      %v751 = vpack.c.bf16 %v727, %v725
      %v752 = vpack.c.bf16 %v728, %v726
      %v753 = vld [vmem:[%s4] sm:$0xff]
      %v754 = vld [vmem:[%s4 + $0x8] sm:$0xff]
      %v755 = vld [vmem:[%s4 + $0x10] sm:$0xff]
      %v756 = vld [vmem:[%s4 + $0x18] sm:$0xff]
      %v757 = vld [vmem:[%s4 + $0x20] sm:$0xff]
      %v758 = vld [vmem:[%s4 + $0x28] sm:$0xff]
      %v759 = vld [vmem:[%s4 + $0x30] sm:$0xff]
      %v760 = vld [vmem:[%s4 + $0x38] sm:$0xff]
      %v761 = vld [vmem:[%s4 + $0x40] sm:$0xff]
      %v762 = vld [vmem:[%s4 + $0x48] sm:$0xff]
      %v763 = vld [vmem:[%s4 + $0x50] sm:$0xff]
      %v764 = vld [vmem:[%s4 + $0x58] sm:$0xff]
      %v765 = vld [vmem:[%s4 + $0x60] sm:$0xff]
      %v766 = vld [vmem:[%s4 + $0x68] sm:$0xff]
      %v767 = vld [vmem:[%s4 + $0x70] sm:$0xff]
      %v768 = vld [vmem:[%s4 + $0x78] sm:$0xff]
      %770 = vset.pattern.permute.xlu0 0
      %771 = vperm.xlu0 %770, %v753
      %v772 = vpop.permute.xlu0 %771
      %775 = vset.pattern.permute.xlu0 0
      %776 = vperm.xlu0 %775, %v754
      %v777 = vpop.permute.xlu0 %776
      %780 = vset.pattern.permute.xlu0 0
      %781 = vperm.xlu0 %780, %v755
      %v782 = vpop.permute.xlu0 %781
      %785 = vset.pattern.permute.xlu0 0
      %786 = vperm.xlu0 %785, %v756
      %v787 = vpop.permute.xlu0 %786
      %790 = vset.pattern.permute.xlu0 0
      %791 = vperm.xlu0 %790, %v757
      %v792 = vpop.permute.xlu0 %791
      %795 = vset.pattern.permute.xlu0 0
      %796 = vperm.xlu0 %795, %v758
      %v797 = vpop.permute.xlu0 %796
      %800 = vset.pattern.permute.xlu0 0
      %801 = vperm.xlu0 %800, %v759
      %v802 = vpop.permute.xlu0 %801
      %805 = vset.pattern.permute.xlu0 0
      %806 = vperm.xlu0 %805, %v760
      %v807 = vpop.permute.xlu0 %806
      %810 = vset.pattern.permute.xlu0 0
      %811 = vperm.xlu0 %810, %v761
      %v812 = vpop.permute.xlu0 %811
      %815 = vset.pattern.permute.xlu0 0
      %816 = vperm.xlu0 %815, %v762
      %v817 = vpop.permute.xlu0 %816
      %820 = vset.pattern.permute.xlu0 0
      %821 = vperm.xlu0 %820, %v763
      %v822 = vpop.permute.xlu0 %821
      %825 = vset.pattern.permute.xlu0 0
      %826 = vperm.xlu0 %825, %v764
      %v827 = vpop.permute.xlu0 %826
      %830 = vset.pattern.permute.xlu0 0
      %831 = vperm.xlu0 %830, %v765
      %v832 = vpop.permute.xlu0 %831
      %835 = vset.pattern.permute.xlu0 0
      %836 = vperm.xlu0 %835, %v766
      %v837 = vpop.permute.xlu0 %836
      %840 = vset.pattern.permute.xlu0 0
      %841 = vperm.xlu0 %840, %v767
      %v842 = vpop.permute.xlu0 %841
      %845 = vset.pattern.permute.xlu0 0
      %846 = vperm.xlu0 %845, %v768
      %v847 = vpop.permute.xlu0 %846
      %v865 = vunpack.c.l.b16 %v729
      %v866 = vunpack.c.l.b16 %v730
      %v867 = vunpack.c.l.b16 %v731
      %v868 = vunpack.c.l.b16 %v732
      %v869 = vunpack.c.l.b16 %v733
      %v870 = vunpack.c.l.b16 %v734
      %v871 = vunpack.c.l.b16 %v735
      %v872 = vunpack.c.l.b16 %v736
      %v873 = vunpack.c.l.b16 %v737
      %v874 = vunpack.c.l.b16 %v738
      %v875 = vunpack.c.l.b16 %v739
      %v876 = vunpack.c.l.b16 %v740
      %v877 = vunpack.c.l.b16 %v741
      %v878 = vunpack.c.l.b16 %v742
      %v879 = vunpack.c.l.b16 %v743
      %v880 = vunpack.c.l.b16 %v744
      %v881 = vpack.c.b16 %v866, %v865
      %v882 = vpack.c.b16 %v868, %v867
      %v883 = vpack.c.b16 %v870, %v869
      %v884 = vpack.c.b16 %v872, %v871
      %v885 = vpack.c.b16 %v874, %v873
      %v886 = vpack.c.b16 %v876, %v875
      %v887 = vpack.c.b16 %v878, %v877
      %v888 = vpack.c.b16 %v880, %v879
      %vm889 = vcmask 523264
      %v891 = vsel %vm889, %v881, 0
      %v894 = vsel %vm889, %v882, 0
      %v897 = vsel %vm889, %v883, 0
      %v900 = vsel %vm889, %v884, 0
      %v903 = vsel %vm889, %v885, 0
      %v906 = vsel %vm889, %v886, 0
      %v909 = vsel %vm889, %v887, 0
      %v912 = vsel %vm889, %v888, 0
      %914 = vmatprep.subr.bf16.mxu0 0
      %915 = vmatpush1.bf16.msra.mxu0 0
      %916 = vmatprep.subr.bf16.mxu0 0
      %917 = vmatpush1.bf16.msra.mxu0 0
      %918 = vmatprep.subr.bf16.mxu0 0
      %919 = vmatpush1.bf16.msra.mxu0 0
      %920 = vmatprep.subr.bf16.mxu0 0
      %921 = vmatpush1.bf16.msra.mxu0 0
      %922 = vmatprep.subr.bf16.mxu0 %v752
      %923 = vmatpush1.bf16.msra.mxu0 %v751
      %924 = vmatprep.subr.bf16.mxu0 %v750
      %925 = vmatpush1.bf16.msra.mxu0 %v749
      %926 = vmatprep.subr.bf16.mxu0 %v748
      %927 = vmatpush1.bf16.msra.mxu0 %v747
      %928 = vmatprep.subr.bf16.mxu0 %v746
      %929 = vmatpush1.bf16.msra.mxu0 %v745
      %930 = vmatprep.subr.bf16.mxu0 0
      %931 = vmatpush2.bf16.msra.mxu0 0
      %932 = vmatprep.subr.bf16.mxu0 0
      %933 = vmatpush2.bf16.msra.mxu0 0
      %934 = vmatprep.subr.bf16.mxu0 0
      %935 = vmatpush2.bf16.msra.mxu0 0
      %936 = vmatprep.subr.bf16.mxu0 0
      %937 = vmatpush2.bf16.msra.mxu0 0
      %938 = vmatprep.subr.bf16.mxu0 0
      %939 = vmatpush2.bf16.msra.mxu0 0
      %940 = vmatprep.subr.bf16.mxu0 0
      %941 = vmatpush2.bf16.msra.mxu0 0
      %942 = vmatprep.subr.bf16.mxu0 0
      %943 = vmatpush2.bf16.msra.mxu0 0
      %944 = vmatprep.subr.bf16.mxu0 0
      %945 = vmatpush2.bf16.msra.mxu0 0
      %946 = vmatprep.mubr.bf16.mxu0 0
      %947 = vmatmul.mubr.bf16.gmra.mxu0 %v891
      %v948 = vpop.f32.mrf.mxu0
      %v949 = vadd.f32 %v772, %v948
      %v950 = vpop.f32.mrf.mxu0
      %v951 = vadd.f32 %v772, %v950
      %v952 = vpop.f32.mrf.mxu0
      %v953 = vadd.f32 %v777, %v952
      %v954 = vpop.f32.mrf.mxu0
      %v955 = vadd.f32 %v777, %v954
      %956 = vmatprep.mubr.bf16.mxu0 0
      %957 = vmatmul.mubr.bf16.gmra.mxu0 %v894
      %v958 = vpop.f32.mrf.mxu0
      %v959 = vadd.f32 %v782, %v958
      %v960 = vpop.f32.mrf.mxu0
      %v961 = vadd.f32 %v782, %v960
      %v962 = vpop.f32.mrf.mxu0
      %v963 = vadd.f32 %v787, %v962
      %v964 = vpop.f32.mrf.mxu0
      %v965 = vadd.f32 %v787, %v964
      %966 = vmatprep.mubr.bf16.mxu0 0
      %967 = vmatmul.mubr.bf16.gmra.mxu0 %v897
      %v968 = vpop.f32.mrf.mxu0
      %v969 = vadd.f32 %v792, %v968
      %v970 = vpop.f32.mrf.mxu0
      %v971 = vadd.f32 %v792, %v970
      %v972 = vpop.f32.mrf.mxu0
      %v973 = vadd.f32 %v797, %v972
      %v974 = vpop.f32.mrf.mxu0
      %v975 = vadd.f32 %v797, %v974
      %976 = vmatprep.mubr.bf16.mxu0 0
      %977 = vmatmul.mubr.bf16.gmra.mxu0 %v900
      %v978 = vpop.f32.mrf.mxu0
      %v979 = vadd.f32 %v802, %v978
      %v980 = vpop.f32.mrf.mxu0
      %v981 = vadd.f32 %v802, %v980
      %v982 = vpop.f32.mrf.mxu0
      %v983 = vadd.f32 %v807, %v982
      %v984 = vpop.f32.mrf.mxu0
      %v985 = vadd.f32 %v807, %v984
      %986 = vmatprep.mubr.bf16.mxu0 0
      %987 = vmatmul.mubr.bf16.gmra.mxu0 %v903
      %v988 = vpop.f32.mrf.mxu0
      %v989 = vadd.f32 %v812, %v988
      %v990 = vpop.f32.mrf.mxu0
      %v991 = vadd.f32 %v812, %v990
      %v992 = vpop.f32.mrf.mxu0
      %v993 = vadd.f32 %v817, %v992
      %v994 = vpop.f32.mrf.mxu0
      %v995 = vadd.f32 %v817, %v994
      %996 = vmatprep.mubr.bf16.mxu0 0
      %997 = vmatmul.mubr.bf16.gmra.mxu0 %v906
      %v998 = vpop.f32.mrf.mxu0
      %v999 = vadd.f32 %v822, %v998
      %v1000 = vpop.f32.mrf.mxu0
      %v1001 = vadd.f32 %v822, %v1000
      %v1002 = vpop.f32.mrf.mxu0
      %v1003 = vadd.f32 %v827, %v1002
      %v1004 = vpop.f32.mrf.mxu0
      %v1005 = vadd.f32 %v827, %v1004
      %1006 = vmatprep.mubr.bf16.mxu0 0
      %1007 = vmatmul.mubr.bf16.gmra.mxu0 %v909
      %v1008 = vpop.f32.mrf.mxu0
      %v1009 = vadd.f32 %v832, %v1008
      %v1010 = vpop.f32.mrf.mxu0
      %v1011 = vadd.f32 %v832, %v1010
      %v1012 = vpop.f32.mrf.mxu0
      %v1013 = vadd.f32 %v837, %v1012
      %v1014 = vpop.f32.mrf.mxu0
      %v1015 = vadd.f32 %v837, %v1014
      %1016 = vmatprep.mubr.bf16.mxu0 0
      %1017 = vmatmul.mubr.bf16.gmra.mxu0 %v912
      %v1018 = vpop.f32.mrf.mxu0
      %v1019 = vadd.f32 %v842, %v1018
      %v1020 = vpop.f32.mrf.mxu0
      %v1021 = vadd.f32 %v842, %v1020
      %v1022 = vpop.f32.mrf.mxu0
      %v1023 = vadd.f32 %v847, %v1022
      %v1024 = vpop.f32.mrf.mxu0
      %v1025 = vadd.f32 %v847, %v1024
      %1026 = vdwg.mxu0
      %vm1027 = vcmp.gt.f32.partialorder %v949, 0.0
      %vm1028 = vcmp.gt.f32.partialorder %v951, 0.0
      %vm1029 = vcmp.gt.f32.partialorder %v953, 0.0
      %vm1030 = vcmp.gt.f32.partialorder %v955, 0.0
      %vm1031 = vcmp.gt.f32.partialorder %v959, 0.0
      %vm1032 = vcmp.gt.f32.partialorder %v961, 0.0
      %vm1033 = vcmp.gt.f32.partialorder %v963, 0.0
      %vm1034 = vcmp.gt.f32.partialorder %v965, 0.0
      %vm1035 = vcmp.gt.f32.partialorder %v969, 0.0
      %vm1036 = vcmp.gt.f32.partialorder %v971, 0.0
      %vm1037 = vcmp.gt.f32.partialorder %v973, 0.0
      %vm1038 = vcmp.gt.f32.partialorder %v975, 0.0
      %vm1039 = vcmp.gt.f32.partialorder %v979, 0.0
      %vm1040 = vcmp.gt.f32.partialorder %v981, 0.0
      %vm1041 = vcmp.gt.f32.partialorder %v983, 0.0
      %vm1042 = vcmp.gt.f32.partialorder %v985, 0.0
      %vm1043 = vcmp.gt.f32.partialorder %v989, 0.0
      %vm1044 = vcmp.gt.f32.partialorder %v991, 0.0
      %vm1045 = vcmp.gt.f32.partialorder %v993, 0.0
      %vm1046 = vcmp.gt.f32.partialorder %v995, 0.0
      %vm1047 = vcmp.gt.f32.partialorder %v999, 0.0
      %vm1048 = vcmp.gt.f32.partialorder %v1001, 0.0
      %vm1049 = vcmp.gt.f32.partialorder %v1003, 0.0
      %vm1050 = vcmp.gt.f32.partialorder %v1005, 0.0
      %vm1051 = vcmp.gt.f32.partialorder %v1009, 0.0
      %vm1052 = vcmp.gt.f32.partialorder %v1011, 0.0
      %vm1053 = vcmp.gt.f32.partialorder %v1013, 0.0
      %vm1054 = vcmp.gt.f32.partialorder %v1015, 0.0
      %vm1055 = vcmp.gt.f32.partialorder %v1019, 0.0
      %vm1056 = vcmp.gt.f32.partialorder %v1021, 0.0
      %vm1057 = vcmp.gt.f32.partialorder %v1023, 0.0
      %vm1058 = vcmp.gt.f32.partialorder %v1025, 0.0
      %v1059 = vmul.f32 %v949, 0.2
      %v1060 = vmul.f32 %v951, 0.2
      %v1061 = vmul.f32 %v953, 0.2
      %v1062 = vmul.f32 %v955, 0.2
      %v1063 = vmul.f32 %v959, 0.2
      %v1064 = vmul.f32 %v961, 0.2
      %v1065 = vmul.f32 %v963, 0.2
      %v1066 = vmul.f32 %v965, 0.2
      %v1067 = vmul.f32 %v969, 0.2
      %v1068 = vmul.f32 %v971, 0.2
      %v1069 = vmul.f32 %v973, 0.2
      %v1070 = vmul.f32 %v975, 0.2
      %v1071 = vmul.f32 %v979, 0.2
      %v1072 = vmul.f32 %v981, 0.2
      %v1073 = vmul.f32 %v983, 0.2
      %v1074 = vmul.f32 %v985, 0.2
      %v1075 = vmul.f32 %v989, 0.2
      %v1076 = vmul.f32 %v991, 0.2
      %v1077 = vmul.f32 %v993, 0.2
      %v1078 = vmul.f32 %v995, 0.2
      %v1079 = vmul.f32 %v999, 0.2
      %v1080 = vmul.f32 %v1001, 0.2
      %v1081 = vmul.f32 %v1003, 0.2
      %v1082 = vmul.f32 %v1005, 0.2
      %v1083 = vmul.f32 %v1009, 0.2
      %v1084 = vmul.f32 %v1011, 0.2
      %v1085 = vmul.f32 %v1013, 0.2
      %v1086 = vmul.f32 %v1015, 0.2
      %v1087 = vmul.f32 %v1019, 0.2
      %v1088 = vmul.f32 %v1021, 0.2
      %v1089 = vmul.f32 %v1023, 0.2
      %v1090 = vmul.f32 %v1025, 0.2
      %v1091 = vsel %vm1027, %v949, %v1059
      %v1092 = vsel %vm1028, %v951, %v1060
      %v1093 = vsel %vm1029, %v953, %v1061
      %v1094 = vsel %vm1030, %v955, %v1062
      %v1095 = vsel %vm1031, %v959, %v1063
      %v1096 = vsel %vm1032, %v961, %v1064
      %v1097 = vsel %vm1033, %v963, %v1065
      %v1098 = vsel %vm1034, %v965, %v1066
      %v1099 = vsel %vm1035, %v969, %v1067
      %v1100 = vsel %vm1036, %v971, %v1068
      %v1101 = vsel %vm1037, %v973, %v1069
      %v1102 = vsel %vm1038, %v975, %v1070
      %v1103 = vsel %vm1039, %v979, %v1071
      %v1104 = vsel %vm1040, %v981, %v1072
      %v1105 = vsel %vm1041, %v983, %v1073
      %v1106 = vsel %vm1042, %v985, %v1074
      %v1107 = vsel %vm1043, %v989, %v1075
      %v1108 = vsel %vm1044, %v991, %v1076
      %v1109 = vsel %vm1045, %v993, %v1077
      %v1110 = vsel %vm1046, %v995, %v1078
      %v1111 = vsel %vm1047, %v999, %v1079
      %v1112 = vsel %vm1048, %v1001, %v1080
      %v1113 = vsel %vm1049, %v1003, %v1081
      %v1114 = vsel %vm1050, %v1005, %v1082
      %v1115 = vsel %vm1051, %v1009, %v1083
      %v1116 = vsel %vm1052, %v1011, %v1084
      %v1117 = vsel %vm1053, %v1013, %v1085
      %v1118 = vsel %vm1054, %v1015, %v1086
      %v1119 = vsel %vm1055, %v1019, %v1087
      %v1120 = vsel %vm1056, %v1021, %v1088
      %v1121 = vsel %vm1057, %v1023, %v1089
      %v1122 = vsel %vm1058, %v1025, %v1090
      %v1123 = vld [vmem:[%s5] sm:$0xff]
      %v1124 = vld [vmem:[%s5 + $0x8] sm:$0xff]
      %v1125 = vld [vmem:[%s5 + $0x10] sm:$0xff]
      %v1126 = vld [vmem:[%s5 + $0x18] sm:$0xff]
      %v1127 = vld [vmem:[%s5 + $0x20] sm:$0xff]
      %v1128 = vld [vmem:[%s5 + $0x28] sm:$0xff]
      %v1129 = vld [vmem:[%s5 + $0x30] sm:$0xff]
      %v1130 = vld [vmem:[%s5 + $0x38] sm:$0xff]
      %v1131 = vld [vmem:[%s5 + $0x40] sm:$0xff]
      %v1132 = vld [vmem:[%s5 + $0x48] sm:$0xff]
      %v1133 = vld [vmem:[%s5 + $0x50] sm:$0xff]
      %v1134 = vld [vmem:[%s5 + $0x58] sm:$0xff]
      %v1135 = vld [vmem:[%s5 + $0x60] sm:$0xff]
      %v1136 = vld [vmem:[%s5 + $0x68] sm:$0xff]
      %v1137 = vld [vmem:[%s5 + $0x70] sm:$0xff]
      %v1138 = vld [vmem:[%s5 + $0x78] sm:$0xff]
      %1140 = vset.pattern.permute.xlu0 0
      %1141 = vperm.xlu0 %1140, %v1123
      %v1142 = vpop.permute.xlu0 %1141
      %1145 = vset.pattern.permute.xlu0 0
      %1146 = vperm.xlu0 %1145, %v1124
      %v1147 = vpop.permute.xlu0 %1146
      %1150 = vset.pattern.permute.xlu0 0
      %1151 = vperm.xlu0 %1150, %v1125
      %v1152 = vpop.permute.xlu0 %1151
      %1155 = vset.pattern.permute.xlu0 0
      %1156 = vperm.xlu0 %1155, %v1126
      %v1157 = vpop.permute.xlu0 %1156
      %1160 = vset.pattern.permute.xlu0 0
      %1161 = vperm.xlu0 %1160, %v1127
      %v1162 = vpop.permute.xlu0 %1161
      %1165 = vset.pattern.permute.xlu0 0
      %1166 = vperm.xlu0 %1165, %v1128
      %v1167 = vpop.permute.xlu0 %1166
      %1170 = vset.pattern.permute.xlu0 0
      %1171 = vperm.xlu0 %1170, %v1129
      %v1172 = vpop.permute.xlu0 %1171
      %1175 = vset.pattern.permute.xlu0 0
      %1176 = vperm.xlu0 %1175, %v1130
      %v1177 = vpop.permute.xlu0 %1176
      %1180 = vset.pattern.permute.xlu0 0
      %1181 = vperm.xlu0 %1180, %v1131
      %v1182 = vpop.permute.xlu0 %1181
      %1185 = vset.pattern.permute.xlu0 0
      %1186 = vperm.xlu0 %1185, %v1132
      %v1187 = vpop.permute.xlu0 %1186
      %1190 = vset.pattern.permute.xlu0 0
      %1191 = vperm.xlu0 %1190, %v1133
      %v1192 = vpop.permute.xlu0 %1191
      %1195 = vset.pattern.permute.xlu0 0
      %1196 = vperm.xlu0 %1195, %v1134
      %v1197 = vpop.permute.xlu0 %1196
      %1200 = vset.pattern.permute.xlu0 0
      %1201 = vperm.xlu0 %1200, %v1135
      %v1202 = vpop.permute.xlu0 %1201
      %1205 = vset.pattern.permute.xlu0 0
      %1206 = vperm.xlu0 %1205, %v1136
      %v1207 = vpop.permute.xlu0 %1206
      %1210 = vset.pattern.permute.xlu0 0
      %1211 = vperm.xlu0 %1210, %v1137
      %v1212 = vpop.permute.xlu0 %1211
      %1215 = vset.pattern.permute.xlu0 0
      %1216 = vperm.xlu0 %1215, %v1138
      %v1217 = vpop.permute.xlu0 %1216
      %v1219 = vmul.f32 %v1091, %v1142
      %v1220 = vmul.f32 %v1092, %v1142
      %v1221 = vmul.f32 %v1093, %v1147
      %v1222 = vmul.f32 %v1094, %v1147
      %v1223 = vmul.f32 %v1095, %v1152
      %v1224 = vmul.f32 %v1096, %v1152
      %v1225 = vmul.f32 %v1097, %v1157
      %v1226 = vmul.f32 %v1098, %v1157
      %v1227 = vmul.f32 %v1099, %v1162
      %v1228 = vmul.f32 %v1100, %v1162
      %v1229 = vmul.f32 %v1101, %v1167
      %v1230 = vmul.f32 %v1102, %v1167
      %v1231 = vmul.f32 %v1103, %v1172
      %v1232 = vmul.f32 %v1104, %v1172
      %v1233 = vmul.f32 %v1105, %v1177
      %v1234 = vmul.f32 %v1106, %v1177
      %v1235 = vmul.f32 %v1107, %v1182
      %v1236 = vmul.f32 %v1108, %v1182
      %v1237 = vmul.f32 %v1109, %v1187
      %v1238 = vmul.f32 %v1110, %v1187
      %v1239 = vmul.f32 %v1111, %v1192
      %v1240 = vmul.f32 %v1112, %v1192
      %v1241 = vmul.f32 %v1113, %v1197
      %v1242 = vmul.f32 %v1114, %v1197
      %v1243 = vmul.f32 %v1115, %v1202
      %v1244 = vmul.f32 %v1116, %v1202
      %v1245 = vmul.f32 %v1117, %v1207
      %v1246 = vmul.f32 %v1118, %v1207
      %v1247 = vmul.f32 %v1119, %v1212
      %v1248 = vmul.f32 %v1120, %v1212
      %v1249 = vmul.f32 %v1121, %v1217
      %v1250 = vmul.f32 %v1122, %v1217
      %v1251 = vadd.f32 %v1219, %v1221
      %v1252 = vadd.f32 %v1251, %v1223
      %v1253 = vadd.f32 %v1252, %v1225
      %v1254 = vadd.f32 %v1253, %v1227
      %v1255 = vadd.f32 %v1254, %v1229
      %v1256 = vadd.f32 %v1255, %v1231
      %v1257 = vadd.f32 %v1256, %v1233
      %v1258 = vadd.f32 %v1257, %v1235
      %v1259 = vadd.f32 %v1258, %v1237
      %v1260 = vadd.f32 %v1259, %v1239
      %v1261 = vadd.f32 %v1260, %v1241
      %v1262 = vadd.f32 %v1261, %v1243
      %v1263 = vadd.f32 %v1262, %v1245
      %v1264 = vadd.f32 %v1263, %v1247
      %v1265 = vadd.f32 %v1264, %v1249
      %v1266 = vrot.slane %v1265, 4
      %v1267 = vadd.f32 %v1265, %v1266
      %v1268 = vrot.slane %v1267, 2
      %v1269 = vadd.f32 %v1267, %v1268
      %v1270 = vrot.slane %v1269, 1
      %v1271 = vadd.f32 %v1269, %v1270
      %v1272 = vadd.f32 %v1220, %v1222
      %v1273 = vadd.f32 %v1272, %v1224
      %v1274 = vadd.f32 %v1273, %v1226
      %v1275 = vadd.f32 %v1274, %v1228
      %v1276 = vadd.f32 %v1275, %v1230
      %v1277 = vadd.f32 %v1276, %v1232
      %v1278 = vadd.f32 %v1277, %v1234
      %v1279 = vadd.f32 %v1278, %v1236
      %v1280 = vadd.f32 %v1279, %v1238
      %v1281 = vadd.f32 %v1280, %v1240
      %v1282 = vadd.f32 %v1281, %v1242
      %v1283 = vadd.f32 %v1282, %v1244
      %v1284 = vadd.f32 %v1283, %v1246
      %v1285 = vadd.f32 %v1284, %v1248
      %v1286 = vadd.f32 %v1285, %v1250
      %v1287 = vrot.slane %v1286, 4
      %v1288 = vadd.f32 %v1286, %v1287
      %v1289 = vrot.slane %v1288, 2
      %v1290 = vadd.f32 %v1288, %v1289
      %v1291 = vrot.slane %v1290, 1
      %v1292 = vadd.f32 %v1290, %v1291
      %v1293 = vld [vmem:[#allocation2] sm:$0x1]
      %1295 = vset.pattern.permute.xlu0 0
      %1296 = vperm.xlu0 %1295, %v1293
      %v1297 = vpop.permute.xlu0 %1296
      %v1299 = vlaneseq
      %v1300 = vshrl.u32 %v1299, 7
      %v1301 = vsub.s32 0, %v1300
      %v1302 = vrot.slane %v1297, %v1301
      %v1303 = vadd.f32 %v1271, %v1302
      %v1304 = vadd.f32 %v1292, %v1302
      %v1307 = vcombine.low %v1303, %v1304
      %v1309 = vunpack.c.l.s4 1966171168
      %v1310 = vunpack.c.0.s8 %v1309
      %v1311 = vlaneseq
      %v1312 = vshrl.u32 %v1311, 7
      %v1313 = vsub.s32 %v1310, %v1312
      %v1314 = vrot.slane %v1307, %v1313
      %v1316 = vunpack.c.l.s4 1966171168
      %v1317 = vunpack.c.0.s8 %v1316
      %v1318 = vlaneseq
      %v1319 = vshrl.u32 %v1318, 7
      %v1320 = vsub.s32 %v1317, %v1319
      %v1321 = vrot.slane %v1314, %v1320
      %v1323 = vlaneseq
      %vm1324 = vcmp.ge.s32.totalorder %v1323, 0
      %vm1325 = vcmp.lt.s32.totalorder %v1323, 256
      %vm1326 = vmand %vm1324, %vm1325
      %1327 = vst.msk [vmem:[%s365] sm:$0x3] %vm1326, %v1321
      %v1328 = vsub.f32 0.0, %v1303
      %v1329 = vsub.f32 0.0, %v1304
      %v1330 = vmul.f32 %v1328, 1.442695
      %v1331 = vpow.pop %v1330
      %v1332 = vmul.f32 %v1329, 1.442695
      %v1333 = vpow.pop %v1332
      %v1334 = vadd.f32 %v1331, 1.0
      %v1335 = vadd.f32 %v1333, 1.0
      %v1336 = vrcp.pop %v1334
      %v1337 = vrcp.pop %v1335
      %v1340 = vcombine.low %v1336, %v1337
      %v1342 = vunpack.c.l.s4 1966171168
      %v1343 = vunpack.c.0.s8 %v1342
      %v1344 = vlaneseq
      %v1345 = vshrl.u32 %v1344, 7
      %v1346 = vsub.s32 %v1343, %v1345
      %v1347 = vrot.slane %v1340, %v1346
      %v1349 = vunpack.c.l.s4 1966171168
      %v1350 = vunpack.c.0.s8 %v1349
      %v1351 = vlaneseq
      %v1352 = vshrl.u32 %v1351, 7
      %v1353 = vsub.s32 %v1350, %v1352
      %v1354 = vrot.slane %v1347, %v1353
      %1356 = vst.msk [vmem:[%s356] sm:$0x3] %vm1326, %v1354
      %s1357 = smul.u32 2, %s27
      %p1358 = scmp.lt.s32.totalorder %s26, 1
      %s1359 = scalar_select %p1358, %s26, 1
      %p1360 = scmp.lt.s32.totalorder %s1357, 1
      %s1361 = scalar_select %p1360, %s1357, 1
      %s1362 = smul.addr %s1359, 2
      %s1363 = sadd.s32 %s1361, %s1362
      %s1364 = scalar_lea.vmem %s7, %s1363
      %s1365 = smul.u32 2, %s27
      %p1366 = scmp.lt.s32.totalorder %s26, 1
      %s1367 = scalar_select %p1366, %s26, 1
      %p1368 = scmp.lt.s32.totalorder %s1365, 1
      %s1369 = scalar_select %p1368, %s1365, 1
      %s1370 = smul.addr %s1367, 2
      %s1371 = sadd.s32 %s1369, %s1370
      %s1372 = scalar_lea.vmem %s8, %s1371
      // Predicated region
      $region49: #{pixelgan_forward.3} parent=47 // pred_check
        %p1373 = pneg %p208
      $region50: #{pixelgan_forward.3} parent=47 // pred_check_branch
        %1375 = sbr.rel (%p1373) target = $region52
      $region51: #{pixelgan_forward.3} parent=47 // pred_region
        %s1376 = smul.u32 2, %s27
      $region52: #{pixelgan_forward.3} parent=47 // pred_fallthru
        _
      // Predicated region
      $region53: #{pixelgan_forward.3} parent=47 // pred_check
        %p1377 = pneg %p236
      $region54: #{pixelgan_forward.3} parent=47 // pred_check_branch
        %1379 = sbr.rel (%p1377) target = $region56
      $region55: #{pixelgan_forward.3} parent=47 // pred_region
        %s1380 = smul.u32 2, %s27
      $region56: #{pixelgan_forward.3} parent=47 // pred_fallthru
        _
    $region48: #{pixelgan_forward.3} parent=5 // pred_fallthru
      _
    %p1381 = scmp.le.s32.totalorder 2, %s17
    // Predicated region
    $region57: #{pixelgan_forward.3} parent=5 // pred_check
      %p1382 = pneg %p1381
    $region58: #{pixelgan_forward.3} parent=5 // pred_check_branch
      %1384 = sbr.rel (%p1382) target = $region60
    $region59: #{pixelgan_forward.3} parent=5 // pred_region
      %s1385 = ssub.s32 %s17, 2
      // Predicated region
      $region61: #{pixelgan_forward.3} parent=59 // pred_check
        %p1386 = pneg %p214
      $region62: #{pixelgan_forward.3} parent=59 // pred_check_branch
        %1388 = sbr.rel (%p1386) target = $region64
      $region63: #{pixelgan_forward.3} parent=59 // pred_region
        %s1389 = smul.u32 2, %s29
        %p1390 = scmp.lt.s32.totalorder %s28, 1
        %s1391 = scalar_select %p1390, %s28, 1
        %p1392 = scmp.lt.s32.totalorder %s1389, 1
        %s1393 = scalar_select %p1392, %s1389, 1
        %s1394 = smul.addr %s1391, 2
        %s1395 = sadd.s32 %s1393, %s1394
        %s1396 = scalar_lea.vmem %s7, %s1395
      $region64: #{pixelgan_forward.3} parent=59 // pred_fallthru
        _
      // Predicated region
      $region65: #{pixelgan_forward.3} parent=59 // pred_check
        %p1397 = pneg %p242
      $region66: #{pixelgan_forward.3} parent=59 // pred_check_branch
        %1399 = sbr.rel (%p1397) target = $region68
      $region67: #{pixelgan_forward.3} parent=59 // pred_region
        %s1400 = smul.u32 2, %s29
        %p1401 = scmp.lt.s32.totalorder %s28, 1
        %s1402 = scalar_select %p1401, %s28, 1
        %p1403 = scmp.lt.s32.totalorder %s1400, 1
        %s1404 = scalar_select %p1403, %s1400, 1
        %s1405 = smul.addr %s1402, 2
        %s1406 = sadd.s32 %s1404, %s1405
        %s1407 = scalar_lea.vmem %s8, %s1406
      $region68: #{pixelgan_forward.3} parent=59 // pred_fallthru
        _
    $region60: #{pixelgan_forward.3} parent=5 // pred_fallthru
      _
  $region6: #{pixelgan_forward.3} parent=0 // loop_footer
    %s21 = sadd.s32 1, %s17
  $region7: #{pixelgan_forward.3} parent=0 // loop_footer_branch
    %16 = sbr.rel target = $region3
  $region8: #{pixelgan_forward.3} parent=0 // loop_exit
    _

</llo_original>
